<compile_context>
chip_gen: v6e
topology: v6e:2x2x1
jax: 0.10.0
libtpu: 0.0.40
codegen_flags: <defaults>
</compile_context>

<pallas_src>
import functools

import jax
import jax.numpy as jnp
from jax import lax
from jax.experimental import pallas as pl
from jax.experimental.pallas import tpu as pltpu


def _lstm_kernel(xproj_ref, wfused_ref, whh1_ref, b1_ref,
                 fw1_ref, fb1_ref, fw2_ref, fb2_ref,
                 out_ref,
                 hproj_s, c0_s, h1_s, c1_s,
                 *, total_T, t_chunk, mask_tail):
    f32 = jnp.float32
    _, B_blk, G = xproj_ref.shape            # (t_chunk, B_blk, 4H)
    H = G // 4
    mm = whh1_ref.dtype                      # MXU operand dtype (bf16), f32 accum
    ci = pl.program_id(1)                    # time-chunk axis (serial)

    @pl.when(ci == 0)
    def _init():
        hproj_s[...] = jnp.zeros_like(hproj_s)
        c0_s[...] = jnp.zeros_like(c0_s)
        h1_s[...] = jnp.zeros_like(h1_s)
        c1_s[...] = jnp.zeros_like(c1_s)

    # Tiny constant-index weights: load once per chunk, keep resident.
    wfused = wfused_ref[...]                 # (H, 8H) = [Whh0 | Wih1]
    whh1 = whh1_ref[...]                     # (H, 4H)
    # Loop-invariant broadcast hoisted out of the unrolled recurrence
    # (JAX does not CSE broadcast_in_dim across unrolled iterations).
    b1 = jnp.broadcast_to(b1_ref[...], (B_blk, G))

    t0 = ci * t_chunk                        # global step index of local step 0

    def gates_to_hc(g, c):
        # Full-width (B, 4H) EUP passes, then static lane slices per gate
        # (PyTorch gate order i, f, g, o).
        s = jax.nn.sigmoid(g)
        th = jnp.tanh(g)
        i = s[:, 0 * H:1 * H]
        f = s[:, 1 * H:2 * H]
        gg = th[:, 2 * H:3 * H]
        o = s[:, 3 * H:4 * H]
        c_new = f * c + i * gg
        h_new = o * jnp.tanh(c_new)
        return h_new, c_new

    def valid_mul(t):
        # 1.0 for real timesteps, 0.0 for padded tail steps (last chunk only).
        return jnp.where((t0 + t) < total_T, 1.0, 0.0).astype(f32)

    def layer0(t, hproj, c0):
        # Layer-0 step t.  hproj holds h0_{t-1} @ [Whh0 | Wih1]; its first 4H
        # lanes are exactly the h-recurrent term of this step's gates (the
        # x @ Wih0 + b0 term was hoisted into xproj in the wrapper).
        g0 = xproj_ref[t] + hproj[:, :4 * H]
        h0, c0_new = gates_to_hc(g0, c0)
        # Single fused MXU push: first 4H lanes feed layer-0 at step t+1,
        # last 4H lanes feed layer-1 at step t (one pipeline stage later).
        # h0 is cast to the MXU dtype exactly once here.
        hproj_new = jnp.dot(h0.astype(mm), wfused, preferred_element_type=f32)
        if mask_tail:
            vf = valid_mul(t)
            hproj_new = vf * hproj_new + (1.0 - vf) * hproj
            c0_new = vf * c0_new + (1.0 - vf) * c0
        return hproj_new, c0_new

    def layer1(t, hproj, h1b, c1):
        # Layer-1 step t.  hproj[:, 4H:] == h0_t @ Wih1 (produced by layer0).
        g1 = hproj[:, 4 * H:] + jnp.dot(h1b, whh1,
                                        preferred_element_type=f32) + b1
        h1_new, c1_new = gates_to_hc(g1, c1)
        if mask_tail:
            vf = valid_mul(t)
            h1_new = vf * h1_new + (1.0 - vf) * h1b.astype(f32)
            c1_new = vf * c1_new + (1.0 - vf) * c1
        return h1_new.astype(mm), c1_new     # carried in MXU dtype

    # ---- Wavefront-skewed recurrence ------------------------------------
    hproj = hproj_s[...]
    c0 = c0_s[...]
    h1b = h1_s[...].astype(mm)               # cast once per chunk
    c1 = c1_s[...]

    # Prologue: layer-0 for local step 0.
    hproj, c0 = layer0(0, hproj, c0)

    def stage(s, carry):
        hproj, c0, h1b, c1 = carry
        # Both calls depend only on previous-stage state, so the layer-1
        # EUP/VPU work overlaps the layer-0 MXU push/pop in the schedule.
        h1b_n, c1_n = layer1(s - 1, hproj, h1b, c1)
        hproj_n, c0_n = layer0(s, hproj, c0)
        return hproj_n, c0_n, h1b_n, c1_n

    hproj, c0, h1b, c1 = lax.fori_loop(1, t_chunk, stage,
                                       (hproj, c0, h1b, c1), unroll=True)

    # Epilogue: layer-1 for the last local step.
    h1b, c1 = layer1(t_chunk - 1, hproj, h1b, c1)

    hproj_s[...] = hproj
    c0_s[...] = c0
    h1_s[...] = h1b.astype(f32)
    c1_s[...] = c1

    @pl.when(ci == pl.num_programs(1) - 1)
    def _finalize():
        hid = jnp.dot(h1b, fw1_ref[...],
                      preferred_element_type=f32) + fb1_ref[...]
        hid = jnp.maximum(hid, 0.0)          # ReLU; Dropout identity in eval
        # Degenerate N=1 head: VPU multiply + lane reduction instead of a
        # wasted MXU push/pop (operands quantized to mm to match reference).
        w2 = fw2_ref[...].astype(f32)        # (1, FC)
        prod = hid.astype(mm).astype(f32) * w2
        out_ref[...] = jnp.sum(prod, axis=-1, keepdims=True) + fb2_ref[...]


def lstm_predictor_forward(x, params, mm_dtype=jnp.bfloat16,
                           max_time_chunk=32, batch_blocks=1):
    """x: (B, T, D) float32 (batch_first, like PyTorch). Returns (B, 1) f32.

    batch_blocks: number of tiles on a leading 'parallel' batch grid axis.
      Keep 1 on single-TensorCore chips (v5e/v6e); use 2 on v7x (2 TCs/chip)
      when the padded batch is >= 16 to shard the recurrence across cores.
    """
    B, T, D = x.shape
    H = params["whh0"].shape[0]
    FC = params["fw1"].shape[1]
    f32 = jnp.float32

    # Pad batch so every batch block is a full multiple of 8 sublanes.
    unit = 8 * batch_blocks
    B_pad = -(-B // unit) * unit
    batch_block = B_pad // batch_blocks
    if B_pad != B:
        x = jnp.pad(x, ((0, B_pad - B), (0, 0), (0, 0)))

    # Balanced time chunks; pad the tail and mask the extra steps in-kernel
    # instead of degrading to a T-step grid for awkward T.
    n_chunks = -(-T // max_time_chunk)
    t_chunk = -(-T // n_chunks)
    T_pad = t_chunk * n_chunks
    mask_tail = (T_pad != T)

    # Hoisted layer-0 input projection (no serial dependence): one big matmul.
    x_tbd = jnp.transpose(x, (1, 0, 2))                        # (T, B_pad, D)
    xproj = (jnp.dot(x_tbd.reshape(T * B_pad, D).astype(mm_dtype),
                     params["wih0"].astype(mm_dtype),
                     preferred_element_type=f32)
             + params["b0"]).reshape(T, B_pad, 4 * H)          # f32, lane-dense
    if T_pad != T:
        xproj = jnp.pad(xproj, ((0, T_pad - T), (0, 0), (0, 0)))

    # Fused recurrent weight: one (B, H) @ (H, 8H) push per step yields both
    # h0_t @ Whh0 (layer-0, step t+1) and h0_t @ Wih1 (layer-1, step t).
    wfused = jnp.concatenate([params["whh0"], params["wih1"]],
                             axis=1).astype(mm_dtype)          # (H, 8H)
    whh1 = params["whh1"].astype(mm_dtype)
    fw1 = params["fw1"].astype(mm_dtype)
    fw2_row = params["fw2"].reshape(1, FC).astype(mm_dtype)
    b1, fb1, fb2 = params["b1"], params["fb1"], params["fb2"]

    kernel = functools.partial(_lstm_kernel, total_T=T, t_chunk=t_chunk,
                               mask_tail=mask_tail)

    full = lambda shape: pl.BlockSpec(shape, lambda b, c: (0,) * len(shape))

    grid_spec = pltpu.PrefetchScalarGridSpec(
        num_scalar_prefetch=0,
        grid=(batch_blocks, n_chunks),
        in_specs=[
            pl.BlockSpec((t_chunk, batch_block, 4 * H),
                         lambda b, c: (c, b, 0)),   # xproj
            full((H, 8 * H)),     # [Whh0 | Wih1] fused (transposed)
            full((H, 4 * H)),     # Whh1 (transposed)
            full((1, 4 * H)),     # b1 = b_ih1 + b_hh1 (folded)
            full((H, FC)),        # fc1 weight (transposed)
            full((1, FC)),        # fc1 bias
            full((1, FC)),        # fc2 weight (as a row)
            full((1, 1)),         # fc2 bias
        ],
        out_specs=pl.BlockSpec((batch_block, 1), lambda b, c: (b, 0)),
        scratch_shapes=[
            pltpu.VMEM((batch_block, 8 * H), f32),   # h0 @ [Whh0|Wih1]
            pltpu.VMEM((batch_block, H), f32),       # c layer 0
            pltpu.VMEM((batch_block, H), f32),       # h layer 1
            pltpu.VMEM((batch_block, H), f32),       # c layer 1
        ],
    )

    out = pl.pallas_call(
        kernel,
        out_shape=jax.ShapeDtypeStruct((B_pad, 1), f32),
        grid_spec=grid_spec,
        compiler_params=pltpu.CompilerParams(
            # batch axis independent (sharded across TCs on v7x),
            # time axis is the serial recurrence.
            dimension_semantics=("parallel", "arbitrary"),
            vmem_limit_bytes=32 * 1024 * 1024,
        ),
    )(xproj, wfused, whh1, b1, fw1, fb1, fw2_row, fb2)

    return out[:B]


def init_params(key, input_dim, hidden_dim, fc_dim=32):
    """Deterministic init mirroring nn.LSTM / nn.Linear shapes.
    Weights are stored transposed: (in_features, out_features).
    b0/b1 are the folded b_ih + b_hh (must be pre-summed when importing
    real PyTorch weights).  Gate order is PyTorch's (i, f, g, o)."""
    ks = jax.random.split(key, 11)
    s = 1.0 / jnp.sqrt(hidden_dim)
    u = lambda k, shape, scale: jax.random.uniform(k, shape, jnp.float32, -scale, scale)
    return {
        "wih0": u(ks[0], (input_dim, 4 * hidden_dim), s),
        "whh0": u(ks[1], (hidden_dim, 4 * hidden_dim), s),
        "b0":   u(ks[2], (1, 4 * hidden_dim), s),
        "wih1": u(ks[3], (hidden_dim, 4 * hidden_dim), s),
        "whh1": u(ks[4], (hidden_dim, 4 * hidden_dim), s),
        "b1":   u(ks[5], (1, 4 * hidden_dim), s),
        "fw1":  u(ks[6], (hidden_dim, fc_dim), 1.0 / jnp.sqrt(hidden_dim)),
        "fb1":  u(ks[7], (1, fc_dim), 1.0 / jnp.sqrt(hidden_dim)),
        "fw2":  u(ks[8], (fc_dim, 1), 1.0 / jnp.sqrt(fc_dim)),
        "fb2":  u(ks[9], (1, 1), 1.0 / jnp.sqrt(fc_dim)),
    }


def reference_forward(x, params, mm_dtype=jnp.bfloat16):
    """Pure-JAX (unfused, unskewed) reference with the same bf16-MXU /
    f32-accumulate precision."""
    B, T, D = x.shape
    H = params["whh0"].shape[0]
    f32 = jnp.float32
    whh0 = params["whh0"].astype(mm_dtype)
    wih1 = params["wih1"].astype(mm_dtype)
    whh1 = params["whh1"].astype(mm_dtype)
    fw1 = params["fw1"].astype(mm_dtype)
    fw2 = params["fw2"].astype(mm_dtype)

    xproj = (jnp.dot(x.reshape(B * T, D).astype(mm_dtype),
                     params["wih0"].astype(mm_dtype),
                     preferred_element_type=f32)
             + params["b0"]).reshape(B, T, 4 * H)

    def gates_to_hc(g, c):
        s = jax.nn.sigmoid(g)
        th = jnp.tanh(g)
        i, f = s[:, 0:H], s[:, H:2 * H]
        gg, o = th[:, 2 * H:3 * H], s[:, 3 * H:4 * H]
        c = f * c + i * gg
        h = o * jnp.tanh(c)
        return h, c

    h0 = c0 = h1 = c1 = jnp.zeros((B, H), f32)
    for t in range(T):
        g0 = xproj[:, t, :] + jnp.dot(h0.astype(mm_dtype), whh0,
                                      preferred_element_type=f32)
        h0, c0 = gates_to_hc(g0, c0)
        g1 = (jnp.dot(h0.astype(mm_dtype), wih1, preferred_element_type=f32)
              + jnp.dot(h1.astype(mm_dtype), whh1, preferred_element_type=f32)
              + params["b1"])
        h1, c1 = gates_to_hc(g1, c1)

    hid = jnp.maximum(jnp.dot(h1.astype(mm_dtype), fw1,
                              preferred_element_type=f32) + params["fb1"], 0.0)
    return jnp.dot(hid.astype(mm_dtype), fw2,
                   preferred_element_type=f32) + params["fb2"]


if __name__ == "__main__":
    master_key = jax.random.PRNGKey(0)

    def check(B, T, D, H, max_time_chunk=32, batch_blocks=1):
        kx, kp = jax.random.split(jax.random.fold_in(master_key, B * 1000 + T))
        x = jax.random.normal(kx, (B, T, D), jnp.float32)
        params = init_params(kp, input_dim=D, hidden_dim=H)
        out = jax.block_until_ready(
            lstm_predictor_forward(x, params, max_time_chunk=max_time_chunk,
                                   batch_blocks=batch_blocks))
        ref = reference_forward(x, params)
        assert out.shape == (B, 1)
        assert jnp.allclose(out, ref, atol=2e-3, rtol=2e-3), (out, ref)

    # Primary small shape implied by the module spec.
    check(B=4, T=8, D=8, H=32)
    # Awkward T (tail-masked chunks) and non-multiple-of-8 batch.
    check(B=5, T=11, D=8, H=32, max_time_chunk=4)
    # Batch-parallel leading grid axis (on v7x this shards across the 2 TCs).
    check(B=20, T=13, D=8, H=32, max_time_chunk=5, batch_blocks=2)

    print("KERNEL_OK")
</pallas_src>

<mosaic_0001>
module attributes {stable_mosaic.version = 11 : i64} {
  func.func @_lstm_kernel(%arg0: i32, %arg1: i32, %arg2: memref<8x8x128xf32, #tpu.memory_space<vmem>>, %arg3: memref<32x256xbf16, #tpu.memory_space<vmem>>, %arg4: memref<32x128xbf16, #tpu.memory_space<vmem>>, %arg5: memref<1x128xf32, #tpu.memory_space<vmem>>, %arg6: memref<32x32xbf16, #tpu.memory_space<vmem>>, %arg7: memref<1x32xf32, #tpu.memory_space<vmem>>, %arg8: memref<1x32xbf16, #tpu.memory_space<vmem>>, %arg9: memref<1x1xf32, #tpu.memory_space<vmem>>, %arg10: memref<8x1xf32, #tpu.memory_space<vmem>>, %arg11: memref<8x256xf32, #tpu.memory_space<vmem>>, %arg12: memref<8x32xf32, #tpu.memory_space<vmem>>, %arg13: memref<8x32xf32, #tpu.memory_space<vmem>>, %arg14: memref<8x32xf32, #tpu.memory_space<vmem>>) attributes {dimension_semantics = [#tpu.dimension_semantics<parallel>, #tpu.dimension_semantics<arbitrary>], iteration_bounds = array<i64: 1, 1>, scalar_prefetch = 0 : i64, scratch_operands = 4 : i64, tpu.core_type = #tpu.core_type<tc>, window_params = [{transform_indices = @transform_0, window_bounds = array<i64: 8, 8, 128>}, {pipeline_mode = #tpu.pipeline_mode<synchronous>, transform_indices = @transform_1, window_bounds = array<i64: 32, 256>}, {pipeline_mode = #tpu.pipeline_mode<synchronous>, transform_indices = @transform_2, window_bounds = array<i64: 32, 128>}, {pipeline_mode = #tpu.pipeline_mode<synchronous>, transform_indices = @transform_3, window_bounds = array<i64: 1, 128>}, {pipeline_mode = #tpu.pipeline_mode<synchronous>, transform_indices = @transform_4, window_bounds = array<i64: 32, 32>}, {pipeline_mode = #tpu.pipeline_mode<synchronous>, transform_indices = @transform_5, window_bounds = array<i64: 1, 32>}, {pipeline_mode = #tpu.pipeline_mode<synchronous>, transform_indices = @transform_6, window_bounds = array<i64: 1, 32>}, {pipeline_mode = #tpu.pipeline_mode<synchronous>, transform_indices = @transform_7, window_bounds = array<i64: 1, 1>}, {transform_indices = @transform_8, window_bounds = array<i64: 8, 1>}]} {
    %c0_i32 = arith.constant 0 : i32
    %0 = arith.cmpi eq, %arg1, %c0_i32 : i32
    %1 = arith.extui %0 : i1 to i32
    %c0_i32_0 = arith.constant 0 : i32
    %2 = arith.cmpi ne, %1, %c0_i32_0 : i32
    scf.if %2 {
      %cst_73 = arith.constant 0.000000e+00 : f32
      %356 = vector.broadcast %cst_73 : f32 to vector<8x256xf32>
      %c0_74 = arith.constant 0 : index
      %c0_75 = arith.constant 0 : index
      %357 = vector.load %arg11[%c0_74, %c0_75] : memref<8x256xf32, #tpu.memory_space<vmem>>, vector<8x256xf32>
      tpu.vector_store %arg11[%c0_74, %c0_75], %356 {strides = array<i32>} : memref<8x256xf32, #tpu.memory_space<vmem>>, vector<8x256xf32>,
      %cst_76 = arith.constant 0.000000e+00 : f32
      %358 = vector.broadcast %cst_76 : f32 to vector<8x32xf32>
      %c0_77 = arith.constant 0 : index
      %c0_78 = arith.constant 0 : index
      %359 = vector.load %arg12[%c0_77, %c0_78] : memref<8x32xf32, #tpu.memory_space<vmem>>, vector<8x32xf32>
      tpu.vector_store %arg12[%c0_77, %c0_78], %358 {strides = array<i32>} : memref<8x32xf32, #tpu.memory_space<vmem>>, vector<8x32xf32>,
      %cst_79 = arith.constant 0.000000e+00 : f32
      %360 = vector.broadcast %cst_79 : f32 to vector<8x32xf32>
      %c0_80 = arith.constant 0 : index
      %c0_81 = arith.constant 0 : index
      %361 = vector.load %arg13[%c0_80, %c0_81] : memref<8x32xf32, #tpu.memory_space<vmem>>, vector<8x32xf32>
      tpu.vector_store %arg13[%c0_80, %c0_81], %360 {strides = array<i32>} : memref<8x32xf32, #tpu.memory_space<vmem>>, vector<8x32xf32>,
      %cst_82 = arith.constant 0.000000e+00 : f32
      %362 = vector.broadcast %cst_82 : f32 to vector<8x32xf32>
      %c0_83 = arith.constant 0 : index
      %c0_84 = arith.constant 0 : index
      %363 = vector.load %arg14[%c0_83, %c0_84] : memref<8x32xf32, #tpu.memory_space<vmem>>, vector<8x32xf32>
      tpu.vector_store %arg14[%c0_83, %c0_84], %362 {strides = array<i32>} : memref<8x32xf32, #tpu.memory_space<vmem>>, vector<8x32xf32>,
    } else {
    }
    %c0 = arith.constant 0 : index
    %c0_1 = arith.constant 0 : index
    %3 = vector.load %arg3[%c0, %c0_1] : memref<32x256xbf16, #tpu.memory_space<vmem>>, vector<32x256xbf16>
    %c0_2 = arith.constant 0 : index
    %c0_3 = arith.constant 0 : index
    %4 = vector.load %arg4[%c0_2, %c0_3] : memref<32x128xbf16, #tpu.memory_space<vmem>>, vector<32x128xbf16>
    %c0_4 = arith.constant 0 : index
    %c0_5 = arith.constant 0 : index
    %5 = vector.load %arg5[%c0_4, %c0_5] : memref<1x128xf32, #tpu.memory_space<vmem>>, vector<1x128xf32>
    %6 = vector.shape_cast %5 : vector<1x128xf32> to vector<1x128xf32>
    %7 = vector.broadcast %6 : vector<1x128xf32> to vector<8x128xf32>
    %c0_6 = arith.constant 0 : index
    %c0_7 = arith.constant 0 : index
    %8 = vector.load %arg11[%c0_6, %c0_7] : memref<8x256xf32, #tpu.memory_space<vmem>>, vector<8x256xf32>
    %c0_8 = arith.constant 0 : index
    %c0_9 = arith.constant 0 : index
    %9 = vector.load %arg12[%c0_8, %c0_9] : memref<8x32xf32, #tpu.memory_space<vmem>>, vector<8x32xf32>
    %c0_10 = arith.constant 0 : index
    %c0_11 = arith.constant 0 : index
    %10 = vector.load %arg13[%c0_10, %c0_11] : memref<8x32xf32, #tpu.memory_space<vmem>>, vector<8x32xf32>
    %11 = arith.truncf %10 : vector<8x32xf32> to vector<8x32xbf16>
    %c0_12 = arith.constant 0 : index
    %c0_13 = arith.constant 0 : index
    %12 = vector.load %arg14[%c0_12, %c0_13] : memref<8x32xf32, #tpu.memory_space<vmem>>, vector<8x32xf32>
    %c0_14 = arith.constant 0 : index
    %c0_15 = arith.constant 0 : index
    %c0_16 = arith.constant 0 : index
    %13 = vector.load %arg2[%c0_14, %c0_15, %c0_16] : memref<8x8x128xf32, #tpu.memory_space<vmem>>, vector<1x8x128xf32>
    %14 = vector.shape_cast %13 : vector<1x8x128xf32> to vector<8x128xf32>
    %15 = vector.extract_strided_slice %8 {offsets = [0, 0], sizes = [8, 128], strides = [1, 1]} : vector<8x256xf32> to vector<8x128xf32>
    %16 = arith.addf %14, %15 : vector<8x128xf32>
    %17 = arith.negf %16 : vector<8x128xf32>
    %18 = math.exp %17 : vector<8x128xf32>
    %cst = arith.constant 1.000000e+00 : f32
    %19 = vector.broadcast %cst : f32 to vector<8x128xf32>
    %20 = arith.addf %19, %18 : vector<8x128xf32>
    %21 = arith.divf %19, %20 : vector<8x128xf32>
    %22 = math.tanh %16 : vector<8x128xf32>
    %23 = vector.extract_strided_slice %21 {offsets = [0, 0], sizes = [8, 32], strides = [1, 1]} : vector<8x128xf32> to vector<8x32xf32>
    %24 = vector.extract_strided_slice %21 {offsets = [0, 32], sizes = [8, 32], strides = [1, 1]} : vector<8x128xf32> to vector<8x32xf32>
    %25 = vector.extract_strided_slice %22 {offsets = [0, 64], sizes = [8, 32], strides = [1, 1]} : vector<8x128xf32> to vector<8x32xf32>
    %26 = vector.extract_strided_slice %21 {offsets = [0, 96], sizes = [8, 32], strides = [1, 1]} : vector<8x128xf32> to vector<8x32xf32>
    %27 = arith.mulf %24, %9 : vector<8x32xf32>
    %28 = arith.mulf %23, %25 : vector<8x32xf32>
    %29 = arith.addf %27, %28 : vector<8x32xf32>
    %30 = math.tanh %29 : vector<8x32xf32>
    %31 = arith.mulf %26, %30 : vector<8x32xf32>
    %32 = arith.truncf %31 : vector<8x32xf32> to vector<8x32xbf16>
    %cst_17 = arith.constant dense<0.000000e+00> : vector<8x256xf32>
    %33 = tpu.matmul %32, %3, %cst_17 {dimension_numbers = #tpu.dot_dimension_numbers<[1], [0], [0], [1], [0, 0, 1, 1], [], []>} : vector<8x32xbf16>, vector<32x256xbf16>, vector<8x256xf32> -> vector<8x256xf32>
    %c1_i32 = arith.constant 1 : i32
    %34 = vector.extract_strided_slice %33 {offsets = [0, 128], sizes = [8, 128], strides = [1, 1]} : vector<8x256xf32> to vector<8x128xf32>
    %cst_18 = arith.constant dense<0.000000e+00> : vector<8x128xf32>
    %35 = tpu.matmul %11, %4, %cst_18 {dimension_numbers = #tpu.dot_dimension_numbers<[1], [0], [0], [1], [0, 0, 1, 1], [], []>} : vector<8x32xbf16>, vector<32x128xbf16>, vector<8x128xf32> -> vector<8x128xf32>
    %36 = arith.addf %34, %35 : vector<8x128xf32>
    %37 = arith.addf %36, %7 : vector<8x128xf32>
    %38 = arith.negf %37 : vector<8x128xf32>
    %39 = math.exp %38 : vector<8x128xf32>
    %cst_19 = arith.constant 1.000000e+00 : f32
    %40 = vector.broadcast %cst_19 : f32 to vector<8x128xf32>
    %41 = arith.addf %40, %39 : vector<8x128xf32>
    %42 = arith.divf %40, %41 : vector<8x128xf32>
    %43 = math.tanh %37 : vector<8x128xf32>
    %44 = vector.extract_strided_slice %42 {offsets = [0, 0], sizes = [8, 32], strides = [1, 1]} : vector<8x128xf32> to vector<8x32xf32>
    %45 = vector.extract_strided_slice %42 {offsets = [0, 32], sizes = [8, 32], strides = [1, 1]} : vector<8x128xf32> to vector<8x32xf32>
    %46 = vector.extract_strided_slice %43 {offsets = [0, 64], sizes = [8, 32], strides = [1, 1]} : vector<8x128xf32> to vector<8x32xf32>
    %47 = vector.extract_strided_slice %42 {offsets = [0, 96], sizes = [8, 32], strides = [1, 1]} : vector<8x128xf32> to vector<8x32xf32>
    %48 = arith.mulf %45, %12 : vector<8x32xf32>
    %49 = arith.mulf %44, %46 : vector<8x32xf32>
    %50 = arith.addf %48, %49 : vector<8x32xf32>
    %51 = math.tanh %50 : vector<8x32xf32>
    %52 = arith.mulf %47, %51 : vector<8x32xf32>
    %53 = arith.truncf %52 : vector<8x32xf32> to vector<8x32xbf16>
    %54 = arith.index_cast %c1_i32 : i32 to index
    %c0_20 = arith.constant 0 : index
    %c0_21 = arith.constant 0 : index
    %55 = vector.load %arg2[%54, %c0_20, %c0_21] : memref<8x8x128xf32, #tpu.memory_space<vmem>>, vector<1x8x128xf32>
    %56 = vector.shape_cast %55 : vector<1x8x128xf32> to vector<8x128xf32>
    %57 = vector.extract_strided_slice %33 {offsets = [0, 0], sizes = [8, 128], strides = [1, 1]} : vector<8x256xf32> to vector<8x128xf32>
    %58 = arith.addf %56, %57 : vector<8x128xf32>
    %59 = arith.negf %58 : vector<8x128xf32>
    %60 = math.exp %59 : vector<8x128xf32>
    %cst_22 = arith.constant 1.000000e+00 : f32
    %61 = vector.broadcast %cst_22 : f32 to vector<8x128xf32>
    %62 = arith.addf %61, %60 : vector<8x128xf32>
    %63 = arith.divf %61, %62 : vector<8x128xf32>
    %64 = math.tanh %58 : vector<8x128xf32>
    %65 = vector.extract_strided_slice %63 {offsets = [0, 0], sizes = [8, 32], strides = [1, 1]} : vector<8x128xf32> to vector<8x32xf32>
    %66 = vector.extract_strided_slice %63 {offsets = [0, 32], sizes = [8, 32], strides = [1, 1]} : vector<8x128xf32> to vector<8x32xf32>
    %67 = vector.extract_strided_slice %64 {offsets = [0, 64], sizes = [8, 32], strides = [1, 1]} : vector<8x128xf32> to vector<8x32xf32>
    %68 = vector.extract_strided_slice %63 {offsets = [0, 96], sizes = [8, 32], strides = [1, 1]} : vector<8x128xf32> to vector<8x32xf32>
    %69 = arith.mulf %66, %29 : vector<8x32xf32>
    %70 = arith.mulf %65, %67 : vector<8x32xf32>
    %71 = arith.addf %69, %70 : vector<8x32xf32>
    %72 = math.tanh %71 : vector<8x32xf32>
    %73 = arith.mulf %68, %72 : vector<8x32xf32>
    %74 = arith.truncf %73 : vector<8x32xf32> to vector<8x32xbf16>
    %cst_23 = arith.constant dense<0.000000e+00> : vector<8x256xf32>
    %75 = tpu.matmul %74, %3, %cst_23 {dimension_numbers = #tpu.dot_dimension_numbers<[1], [0], [0], [1], [0, 0, 1, 1], [], []>} : vector<8x32xbf16>, vector<32x256xbf16>, vector<8x256xf32> -> vector<8x256xf32>
    %c2_i32 = arith.constant 2 : i32
    %76 = vector.extract_strided_slice %75 {offsets = [0, 128], sizes = [8, 128], strides = [1, 1]} : vector<8x256xf32> to vector<8x128xf32>
    %cst_24 = arith.constant dense<0.000000e+00> : vector<8x128xf32>
    %77 = tpu.matmul %53, %4, %cst_24 {dimension_numbers = #tpu.dot_dimension_numbers<[1], [0], [0], [1], [0, 0, 1, 1], [], []>} : vector<8x32xbf16>, vector<32x128xbf16>, vector<8x128xf32> -> vector<8x128xf32>
    %78 = arith.addf %76, %77 : vector<8x128xf32>
    %79 = arith.addf %78, %7 : vector<8x128xf32>
    %80 = arith.negf %79 : vector<8x128xf32>
    %81 = math.exp %80 : vector<8x128xf32>
    %cst_25 = arith.constant 1.000000e+00 : f32
    %82 = vector.broadcast %cst_25 : f32 to vector<8x128xf32>
    %83 = arith.addf %82, %81 : vector<8x128xf32>
    %84 = arith.divf %82, %83 : vector<8x128xf32>
    %85 = math.tanh %79 : vector<8x128xf32>
    %86 = vector.extract_strided_slice %84 {offsets = [0, 0], sizes = [8, 32], strides = [1, 1]} : vector<8x128xf32> to vector<8x32xf32>
    %87 = vector.extract_strided_slice %84 {offsets = [0, 32], sizes = [8, 32], strides = [1, 1]} : vector<8x128xf32> to vector<8x32xf32>
    %88 = vector.extract_strided_slice %85 {offsets = [0, 64], sizes = [8, 32], strides = [1, 1]} : vector<8x128xf32> to vector<8x32xf32>
    %89 = vector.extract_strided_slice %84 {offsets = [0, 96], sizes = [8, 32], strides = [1, 1]} : vector<8x128xf32> to vector<8x32xf32>
    %90 = arith.mulf %87, %50 : vector<8x32xf32>
    %91 = arith.mulf %86, %88 : vector<8x32xf32>
    %92 = arith.addf %90, %91 : vector<8x32xf32>
    %93 = math.tanh %92 : vector<8x32xf32>
    %94 = arith.mulf %89, %93 : vector<8x32xf32>
    %95 = arith.truncf %94 : vector<8x32xf32> to vector<8x32xbf16>
    %96 = arith.index_cast %c2_i32 : i32 to index
    %c0_26 = arith.constant 0 : index
    %c0_27 = arith.constant 0 : index
    %97 = vector.load %arg2[%96, %c0_26, %c0_27] : memref<8x8x128xf32, #tpu.memory_space<vmem>>, vector<1x8x128xf32>
    %98 = vector.shape_cast %97 : vector<1x8x128xf32> to vector<8x128xf32>
    %99 = vector.extract_strided_slice %75 {offsets = [0, 0], sizes = [8, 128], strides = [1, 1]} : vector<8x256xf32> to vector<8x128xf32>
    %100 = arith.addf %98, %99 : vector<8x128xf32>
    %101 = arith.negf %100 : vector<8x128xf32>
    %102 = math.exp %101 : vector<8x128xf32>
    %cst_28 = arith.constant 1.000000e+00 : f32
    %103 = vector.broadcast %cst_28 : f32 to vector<8x128xf32>
    %104 = arith.addf %103, %102 : vector<8x128xf32>
    %105 = arith.divf %103, %104 : vector<8x128xf32>
    %106 = math.tanh %100 : vector<8x128xf32>
    %107 = vector.extract_strided_slice %105 {offsets = [0, 0], sizes = [8, 32], strides = [1, 1]} : vector<8x128xf32> to vector<8x32xf32>
    %108 = vector.extract_strided_slice %105 {offsets = [0, 32], sizes = [8, 32], strides = [1, 1]} : vector<8x128xf32> to vector<8x32xf32>
    %109 = vector.extract_strided_slice %106 {offsets = [0, 64], sizes = [8, 32], strides = [1, 1]} : vector<8x128xf32> to vector<8x32xf32>
    %110 = vector.extract_strided_slice %105 {offsets = [0, 96], sizes = [8, 32], strides = [1, 1]} : vector<8x128xf32> to vector<8x32xf32>
    %111 = arith.mulf %108, %71 : vector<8x32xf32>
    %112 = arith.mulf %107, %109 : vector<8x32xf32>
    %113 = arith.addf %111, %112 : vector<8x32xf32>
    %114 = math.tanh %113 : vector<8x32xf32>
    %115 = arith.mulf %110, %114 : vector<8x32xf32>
    %116 = arith.truncf %115 : vector<8x32xf32> to vector<8x32xbf16>
    %cst_29 = arith.constant dense<0.000000e+00> : vector<8x256xf32>
    %117 = tpu.matmul %116, %3, %cst_29 {dimension_numbers = #tpu.dot_dimension_numbers<[1], [0], [0], [1], [0, 0, 1, 1], [], []>} : vector<8x32xbf16>, vector<32x256xbf16>, vector<8x256xf32> -> vector<8x256xf32>
    %c3_i32 = arith.constant 3 : i32
    %118 = vector.extract_strided_slice %117 {offsets = [0, 128], sizes = [8, 128], strides = [1, 1]} : vector<8x256xf32> to vector<8x128xf32>
    %cst_30 = arith.constant dense<0.000000e+00> : vector<8x128xf32>
    %119 = tpu.matmul %95, %4, %cst_30 {dimension_numbers = #tpu.dot_dimension_numbers<[1], [0], [0], [1], [0, 0, 1, 1], [], []>} : vector<8x32xbf16>, vector<32x128xbf16>, vector<8x128xf32> -> vector<8x128xf32>
    %120 = arith.addf %118, %119 : vector<8x128xf32>
    %121 = arith.addf %120, %7 : vector<8x128xf32>
    %122 = arith.negf %121 : vector<8x128xf32>
    %123 = math.exp %122 : vector<8x128xf32>
    %cst_31 = arith.constant 1.000000e+00 : f32
    %124 = vector.broadcast %cst_31 : f32 to vector<8x128xf32>
    %125 = arith.addf %124, %123 : vector<8x128xf32>
    %126 = arith.divf %124, %125 : vector<8x128xf32>
    %127 = math.tanh %121 : vector<8x128xf32>
    %128 = vector.extract_strided_slice %126 {offsets = [0, 0], sizes = [8, 32], strides = [1, 1]} : vector<8x128xf32> to vector<8x32xf32>
    %129 = vector.extract_strided_slice %126 {offsets = [0, 32], sizes = [8, 32], strides = [1, 1]} : vector<8x128xf32> to vector<8x32xf32>
    %130 = vector.extract_strided_slice %127 {offsets = [0, 64], sizes = [8, 32], strides = [1, 1]} : vector<8x128xf32> to vector<8x32xf32>
    %131 = vector.extract_strided_slice %126 {offsets = [0, 96], sizes = [8, 32], strides = [1, 1]} : vector<8x128xf32> to vector<8x32xf32>
    %132 = arith.mulf %129, %92 : vector<8x32xf32>
    %133 = arith.mulf %128, %130 : vector<8x32xf32>
    %134 = arith.addf %132, %133 : vector<8x32xf32>
    %135 = math.tanh %134 : vector<8x32xf32>
    %136 = arith.mulf %131, %135 : vector<8x32xf32>
    %137 = arith.truncf %136 : vector<8x32xf32> to vector<8x32xbf16>
    %138 = arith.index_cast %c3_i32 : i32 to index
    %c0_32 = arith.constant 0 : index
    %c0_33 = arith.constant 0 : index
    %139 = vector.load %arg2[%138, %c0_32, %c0_33] : memref<8x8x128xf32, #tpu.memory_space<vmem>>, vector<1x8x128xf32>
    %140 = vector.shape_cast %139 : vector<1x8x128xf32> to vector<8x128xf32>
    %141 = vector.extract_strided_slice %117 {offsets = [0, 0], sizes = [8, 128], strides = [1, 1]} : vector<8x256xf32> to vector<8x128xf32>
    %142 = arith.addf %140, %141 : vector<8x128xf32>
    %143 = arith.negf %142 : vector<8x128xf32>
    %144 = math.exp %143 : vector<8x128xf32>
    %cst_34 = arith.constant 1.000000e+00 : f32
    %145 = vector.broadcast %cst_34 : f32 to vector<8x128xf32>
    %146 = arith.addf %145, %144 : vector<8x128xf32>
    %147 = arith.divf %145, %146 : vector<8x128xf32>
    %148 = math.tanh %142 : vector<8x128xf32>
    %149 = vector.extract_strided_slice %147 {offsets = [0, 0], sizes = [8, 32], strides = [1, 1]} : vector<8x128xf32> to vector<8x32xf32>
    %150 = vector.extract_strided_slice %147 {offsets = [0, 32], sizes = [8, 32], strides = [1, 1]} : vector<8x128xf32> to vector<8x32xf32>
    %151 = vector.extract_strided_slice %148 {offsets = [0, 64], sizes = [8, 32], strides = [1, 1]} : vector<8x128xf32> to vector<8x32xf32>
    %152 = vector.extract_strided_slice %147 {offsets = [0, 96], sizes = [8, 32], strides = [1, 1]} : vector<8x128xf32> to vector<8x32xf32>
    %153 = arith.mulf %150, %113 : vector<8x32xf32>
    %154 = arith.mulf %149, %151 : vector<8x32xf32>
    %155 = arith.addf %153, %154 : vector<8x32xf32>
    %156 = math.tanh %155 : vector<8x32xf32>
    %157 = arith.mulf %152, %156 : vector<8x32xf32>
    %158 = arith.truncf %157 : vector<8x32xf32> to vector<8x32xbf16>
    %cst_35 = arith.constant dense<0.000000e+00> : vector<8x256xf32>
    %159 = tpu.matmul %158, %3, %cst_35 {dimension_numbers = #tpu.dot_dimension_numbers<[1], [0], [0], [1], [0, 0, 1, 1], [], []>} : vector<8x32xbf16>, vector<32x256xbf16>, vector<8x256xf32> -> vector<8x256xf32>
    %c4_i32 = arith.constant 4 : i32
    %160 = vector.extract_strided_slice %159 {offsets = [0, 128], sizes = [8, 128], strides = [1, 1]} : vector<8x256xf32> to vector<8x128xf32>
    %cst_36 = arith.constant dense<0.000000e+00> : vector<8x128xf32>
    %161 = tpu.matmul %137, %4, %cst_36 {dimension_numbers = #tpu.dot_dimension_numbers<[1], [0], [0], [1], [0, 0, 1, 1], [], []>} : vector<8x32xbf16>, vector<32x128xbf16>, vector<8x128xf32> -> vector<8x128xf32>
    %162 = arith.addf %160, %161 : vector<8x128xf32>
    %163 = arith.addf %162, %7 : vector<8x128xf32>
    %164 = arith.negf %163 : vector<8x128xf32>
    %165 = math.exp %164 : vector<8x128xf32>
    %cst_37 = arith.constant 1.000000e+00 : f32
    %166 = vector.broadcast %cst_37 : f32 to vector<8x128xf32>
    %167 = arith.addf %166, %165 : vector<8x128xf32>
    %168 = arith.divf %166, %167 : vector<8x128xf32>
    %169 = math.tanh %163 : vector<8x128xf32>
    %170 = vector.extract_strided_slice %168 {offsets = [0, 0], sizes = [8, 32], strides = [1, 1]} : vector<8x128xf32> to vector<8x32xf32>
    %171 = vector.extract_strided_slice %168 {offsets = [0, 32], sizes = [8, 32], strides = [1, 1]} : vector<8x128xf32> to vector<8x32xf32>
    %172 = vector.extract_strided_slice %169 {offsets = [0, 64], sizes = [8, 32], strides = [1, 1]} : vector<8x128xf32> to vector<8x32xf32>
    %173 = vector.extract_strided_slice %168 {offsets = [0, 96], sizes = [8, 32], strides = [1, 1]} : vector<8x128xf32> to vector<8x32xf32>
    %174 = arith.mulf %171, %134 : vector<8x32xf32>
    %175 = arith.mulf %170, %172 : vector<8x32xf32>
    %176 = arith.addf %174, %175 : vector<8x32xf32>
    %177 = math.tanh %176 : vector<8x32xf32>
    %178 = arith.mulf %173, %177 : vector<8x32xf32>
    %179 = arith.truncf %178 : vector<8x32xf32> to vector<8x32xbf16>
    %180 = arith.index_cast %c4_i32 : i32 to index
    %c0_38 = arith.constant 0 : index
    %c0_39 = arith.constant 0 : index
    %181 = vector.load %arg2[%180, %c0_38, %c0_39] : memref<8x8x128xf32, #tpu.memory_space<vmem>>, vector<1x8x128xf32>
    %182 = vector.shape_cast %181 : vector<1x8x128xf32> to vector<8x128xf32>
    %183 = vector.extract_strided_slice %159 {offsets = [0, 0], sizes = [8, 128], strides = [1, 1]} : vector<8x256xf32> to vector<8x128xf32>
    %184 = arith.addf %182, %183 : vector<8x128xf32>
    %185 = arith.negf %184 : vector<8x128xf32>
    %186 = math.exp %185 : vector<8x128xf32>
    %cst_40 = arith.constant 1.000000e+00 : f32
    %187 = vector.broadcast %cst_40 : f32 to vector<8x128xf32>
    %188 = arith.addf %187, %186 : vector<8x128xf32>
    %189 = arith.divf %187, %188 : vector<8x128xf32>
    %190 = math.tanh %184 : vector<8x128xf32>
    %191 = vector.extract_strided_slice %189 {offsets = [0, 0], sizes = [8, 32], strides = [1, 1]} : vector<8x128xf32> to vector<8x32xf32>
    %192 = vector.extract_strided_slice %189 {offsets = [0, 32], sizes = [8, 32], strides = [1, 1]} : vector<8x128xf32> to vector<8x32xf32>
    %193 = vector.extract_strided_slice %190 {offsets = [0, 64], sizes = [8, 32], strides = [1, 1]} : vector<8x128xf32> to vector<8x32xf32>
    %194 = vector.extract_strided_slice %189 {offsets = [0, 96], sizes = [8, 32], strides = [1, 1]} : vector<8x128xf32> to vector<8x32xf32>
    %195 = arith.mulf %192, %155 : vector<8x32xf32>
    %196 = arith.mulf %191, %193 : vector<8x32xf32>
    %197 = arith.addf %195, %196 : vector<8x32xf32>
    %198 = math.tanh %197 : vector<8x32xf32>
    %199 = arith.mulf %194, %198 : vector<8x32xf32>
    %200 = arith.truncf %199 : vector<8x32xf32> to vector<8x32xbf16>
    %cst_41 = arith.constant dense<0.000000e+00> : vector<8x256xf32>
    %201 = tpu.matmul %200, %3, %cst_41 {dimension_numbers = #tpu.dot_dimension_numbers<[1], [0], [0], [1], [0, 0, 1, 1], [], []>} : vector<8x32xbf16>, vector<32x256xbf16>, vector<8x256xf32> -> vector<8x256xf32>
    %c5_i32 = arith.constant 5 : i32
    %202 = vector.extract_strided_slice %201 {offsets = [0, 128], sizes = [8, 128], strides = [1, 1]} : vector<8x256xf32> to vector<8x128xf32>
    %cst_42 = arith.constant dense<0.000000e+00> : vector<8x128xf32>
    %203 = tpu.matmul %179, %4, %cst_42 {dimension_numbers = #tpu.dot_dimension_numbers<[1], [0], [0], [1], [0, 0, 1, 1], [], []>} : vector<8x32xbf16>, vector<32x128xbf16>, vector<8x128xf32> -> vector<8x128xf32>
    %204 = arith.addf %202, %203 : vector<8x128xf32>
    %205 = arith.addf %204, %7 : vector<8x128xf32>
    %206 = arith.negf %205 : vector<8x128xf32>
    %207 = math.exp %206 : vector<8x128xf32>
    %cst_43 = arith.constant 1.000000e+00 : f32
    %208 = vector.broadcast %cst_43 : f32 to vector<8x128xf32>
    %209 = arith.addf %208, %207 : vector<8x128xf32>
    %210 = arith.divf %208, %209 : vector<8x128xf32>
    %211 = math.tanh %205 : vector<8x128xf32>
    %212 = vector.extract_strided_slice %210 {offsets = [0, 0], sizes = [8, 32], strides = [1, 1]} : vector<8x128xf32> to vector<8x32xf32>
    %213 = vector.extract_strided_slice %210 {offsets = [0, 32], sizes = [8, 32], strides = [1, 1]} : vector<8x128xf32> to vector<8x32xf32>
    %214 = vector.extract_strided_slice %211 {offsets = [0, 64], sizes = [8, 32], strides = [1, 1]} : vector<8x128xf32> to vector<8x32xf32>
    %215 = vector.extract_strided_slice %210 {offsets = [0, 96], sizes = [8, 32], strides = [1, 1]} : vector<8x128xf32> to vector<8x32xf32>
    %216 = arith.mulf %213, %176 : vector<8x32xf32>
    %217 = arith.mulf %212, %214 : vector<8x32xf32>
    %218 = arith.addf %216, %217 : vector<8x32xf32>
    %219 = math.tanh %218 : vector<8x32xf32>
    %220 = arith.mulf %215, %219 : vector<8x32xf32>
    %221 = arith.truncf %220 : vector<8x32xf32> to vector<8x32xbf16>
    %222 = arith.index_cast %c5_i32 : i32 to index
    %c0_44 = arith.constant 0 : index
    %c0_45 = arith.constant 0 : index
    %223 = vector.load %arg2[%222, %c0_44, %c0_45] : memref<8x8x128xf32, #tpu.memory_space<vmem>>, vector<1x8x128xf32>
    %224 = vector.shape_cast %223 : vector<1x8x128xf32> to vector<8x128xf32>
    %225 = vector.extract_strided_slice %201 {offsets = [0, 0], sizes = [8, 128], strides = [1, 1]} : vector<8x256xf32> to vector<8x128xf32>
    %226 = arith.addf %224, %225 : vector<8x128xf32>
    %227 = arith.negf %226 : vector<8x128xf32>
    %228 = math.exp %227 : vector<8x128xf32>
    %cst_46 = arith.constant 1.000000e+00 : f32
    %229 = vector.broadcast %cst_46 : f32 to vector<8x128xf32>
    %230 = arith.addf %229, %228 : vector<8x128xf32>
    %231 = arith.divf %229, %230 : vector<8x128xf32>
    %232 = math.tanh %226 : vector<8x128xf32>
    %233 = vector.extract_strided_slice %231 {offsets = [0, 0], sizes = [8, 32], strides = [1, 1]} : vector<8x128xf32> to vector<8x32xf32>
    %234 = vector.extract_strided_slice %231 {offsets = [0, 32], sizes = [8, 32], strides = [1, 1]} : vector<8x128xf32> to vector<8x32xf32>
    %235 = vector.extract_strided_slice %232 {offsets = [0, 64], sizes = [8, 32], strides = [1, 1]} : vector<8x128xf32> to vector<8x32xf32>
    %236 = vector.extract_strided_slice %231 {offsets = [0, 96], sizes = [8, 32], strides = [1, 1]} : vector<8x128xf32> to vector<8x32xf32>
    %237 = arith.mulf %234, %197 : vector<8x32xf32>
    %238 = arith.mulf %233, %235 : vector<8x32xf32>
    %239 = arith.addf %237, %238 : vector<8x32xf32>
    %240 = math.tanh %239 : vector<8x32xf32>
    %241 = arith.mulf %236, %240 : vector<8x32xf32>
    %242 = arith.truncf %241 : vector<8x32xf32> to vector<8x32xbf16>
    %cst_47 = arith.constant dense<0.000000e+00> : vector<8x256xf32>
    %243 = tpu.matmul %242, %3, %cst_47 {dimension_numbers = #tpu.dot_dimension_numbers<[1], [0], [0], [1], [0, 0, 1, 1], [], []>} : vector<8x32xbf16>, vector<32x256xbf16>, vector<8x256xf32> -> vector<8x256xf32>
    %c6_i32 = arith.constant 6 : i32
    %244 = vector.extract_strided_slice %243 {offsets = [0, 128], sizes = [8, 128], strides = [1, 1]} : vector<8x256xf32> to vector<8x128xf32>
    %cst_48 = arith.constant dense<0.000000e+00> : vector<8x128xf32>
    %245 = tpu.matmul %221, %4, %cst_48 {dimension_numbers = #tpu.dot_dimension_numbers<[1], [0], [0], [1], [0, 0, 1, 1], [], []>} : vector<8x32xbf16>, vector<32x128xbf16>, vector<8x128xf32> -> vector<8x128xf32>
    %246 = arith.addf %244, %245 : vector<8x128xf32>
    %247 = arith.addf %246, %7 : vector<8x128xf32>
    %248 = arith.negf %247 : vector<8x128xf32>
    %249 = math.exp %248 : vector<8x128xf32>
    %cst_49 = arith.constant 1.000000e+00 : f32
    %250 = vector.broadcast %cst_49 : f32 to vector<8x128xf32>
    %251 = arith.addf %250, %249 : vector<8x128xf32>
    %252 = arith.divf %250, %251 : vector<8x128xf32>
    %253 = math.tanh %247 : vector<8x128xf32>
    %254 = vector.extract_strided_slice %252 {offsets = [0, 0], sizes = [8, 32], strides = [1, 1]} : vector<8x128xf32> to vector<8x32xf32>
    %255 = vector.extract_strided_slice %252 {offsets = [0, 32], sizes = [8, 32], strides = [1, 1]} : vector<8x128xf32> to vector<8x32xf32>
    %256 = vector.extract_strided_slice %253 {offsets = [0, 64], sizes = [8, 32], strides = [1, 1]} : vector<8x128xf32> to vector<8x32xf32>
    %257 = vector.extract_strided_slice %252 {offsets = [0, 96], sizes = [8, 32], strides = [1, 1]} : vector<8x128xf32> to vector<8x32xf32>
    %258 = arith.mulf %255, %218 : vector<8x32xf32>
    %259 = arith.mulf %254, %256 : vector<8x32xf32>
    %260 = arith.addf %258, %259 : vector<8x32xf32>
    %261 = math.tanh %260 : vector<8x32xf32>
    %262 = arith.mulf %257, %261 : vector<8x32xf32>
    %263 = arith.truncf %262 : vector<8x32xf32> to vector<8x32xbf16>
    %264 = arith.index_cast %c6_i32 : i32 to index
    %c0_50 = arith.constant 0 : index
    %c0_51 = arith.constant 0 : index
    %265 = vector.load %arg2[%264, %c0_50, %c0_51] : memref<8x8x128xf32, #tpu.memory_space<vmem>>, vector<1x8x128xf32>
    %266 = vector.shape_cast %265 : vector<1x8x128xf32> to vector<8x128xf32>
    %267 = vector.extract_strided_slice %243 {offsets = [0, 0], sizes = [8, 128], strides = [1, 1]} : vector<8x256xf32> to vector<8x128xf32>
    %268 = arith.addf %266, %267 : vector<8x128xf32>
    %269 = arith.negf %268 : vector<8x128xf32>
    %270 = math.exp %269 : vector<8x128xf32>
    %cst_52 = arith.constant 1.000000e+00 : f32
    %271 = vector.broadcast %cst_52 : f32 to vector<8x128xf32>
    %272 = arith.addf %271, %270 : vector<8x128xf32>
    %273 = arith.divf %271, %272 : vector<8x128xf32>
    %274 = math.tanh %268 : vector<8x128xf32>
    %275 = vector.extract_strided_slice %273 {offsets = [0, 0], sizes = [8, 32], strides = [1, 1]} : vector<8x128xf32> to vector<8x32xf32>
    %276 = vector.extract_strided_slice %273 {offsets = [0, 32], sizes = [8, 32], strides = [1, 1]} : vector<8x128xf32> to vector<8x32xf32>
    %277 = vector.extract_strided_slice %274 {offsets = [0, 64], sizes = [8, 32], strides = [1, 1]} : vector<8x128xf32> to vector<8x32xf32>
    %278 = vector.extract_strided_slice %273 {offsets = [0, 96], sizes = [8, 32], strides = [1, 1]} : vector<8x128xf32> to vector<8x32xf32>
    %279 = arith.mulf %276, %239 : vector<8x32xf32>
    %280 = arith.mulf %275, %277 : vector<8x32xf32>
    %281 = arith.addf %279, %280 : vector<8x32xf32>
    %282 = math.tanh %281 : vector<8x32xf32>
    %283 = arith.mulf %278, %282 : vector<8x32xf32>
    %284 = arith.truncf %283 : vector<8x32xf32> to vector<8x32xbf16>
    %cst_53 = arith.constant dense<0.000000e+00> : vector<8x256xf32>
    %285 = tpu.matmul %284, %3, %cst_53 {dimension_numbers = #tpu.dot_dimension_numbers<[1], [0], [0], [1], [0, 0, 1, 1], [], []>} : vector<8x32xbf16>, vector<32x256xbf16>, vector<8x256xf32> -> vector<8x256xf32>
    %c7_i32 = arith.constant 7 : i32
    %286 = vector.extract_strided_slice %285 {offsets = [0, 128], sizes = [8, 128], strides = [1, 1]} : vector<8x256xf32> to vector<8x128xf32>
    %cst_54 = arith.constant dense<0.000000e+00> : vector<8x128xf32>
    %287 = tpu.matmul %263, %4, %cst_54 {dimension_numbers = #tpu.dot_dimension_numbers<[1], [0], [0], [1], [0, 0, 1, 1], [], []>} : vector<8x32xbf16>, vector<32x128xbf16>, vector<8x128xf32> -> vector<8x128xf32>
    %288 = arith.addf %286, %287 : vector<8x128xf32>
    %289 = arith.addf %288, %7 : vector<8x128xf32>
    %290 = arith.negf %289 : vector<8x128xf32>
    %291 = math.exp %290 : vector<8x128xf32>
    %cst_55 = arith.constant 1.000000e+00 : f32
    %292 = vector.broadcast %cst_55 : f32 to vector<8x128xf32>
    %293 = arith.addf %292, %291 : vector<8x128xf32>
    %294 = arith.divf %292, %293 : vector<8x128xf32>
    %295 = math.tanh %289 : vector<8x128xf32>
    %296 = vector.extract_strided_slice %294 {offsets = [0, 0], sizes = [8, 32], strides = [1, 1]} : vector<8x128xf32> to vector<8x32xf32>
    %297 = vector.extract_strided_slice %294 {offsets = [0, 32], sizes = [8, 32], strides = [1, 1]} : vector<8x128xf32> to vector<8x32xf32>
    %298 = vector.extract_strided_slice %295 {offsets = [0, 64], sizes = [8, 32], strides = [1, 1]} : vector<8x128xf32> to vector<8x32xf32>
    %299 = vector.extract_strided_slice %294 {offsets = [0, 96], sizes = [8, 32], strides = [1, 1]} : vector<8x128xf32> to vector<8x32xf32>
    %300 = arith.mulf %297, %260 : vector<8x32xf32>
    %301 = arith.mulf %296, %298 : vector<8x32xf32>
    %302 = arith.addf %300, %301 : vector<8x32xf32>
    %303 = math.tanh %302 : vector<8x32xf32>
    %304 = arith.mulf %299, %303 : vector<8x32xf32>
    %305 = arith.truncf %304 : vector<8x32xf32> to vector<8x32xbf16>
    %306 = arith.index_cast %c7_i32 : i32 to index
    %c0_56 = arith.constant 0 : index
    %c0_57 = arith.constant 0 : index
    %307 = vector.load %arg2[%306, %c0_56, %c0_57] : memref<8x8x128xf32, #tpu.memory_space<vmem>>, vector<1x8x128xf32>
    %308 = vector.shape_cast %307 : vector<1x8x128xf32> to vector<8x128xf32>
    %309 = vector.extract_strided_slice %285 {offsets = [0, 0], sizes = [8, 128], strides = [1, 1]} : vector<8x256xf32> to vector<8x128xf32>
    %310 = arith.addf %308, %309 : vector<8x128xf32>
    %311 = arith.negf %310 : vector<8x128xf32>
    %312 = math.exp %311 : vector<8x128xf32>
    %cst_58 = arith.constant 1.000000e+00 : f32
    %313 = vector.broadcast %cst_58 : f32 to vector<8x128xf32>
    %314 = arith.addf %313, %312 : vector<8x128xf32>
    %315 = arith.divf %313, %314 : vector<8x128xf32>
    %316 = math.tanh %310 : vector<8x128xf32>
    %317 = vector.extract_strided_slice %315 {offsets = [0, 0], sizes = [8, 32], strides = [1, 1]} : vector<8x128xf32> to vector<8x32xf32>
    %318 = vector.extract_strided_slice %315 {offsets = [0, 32], sizes = [8, 32], strides = [1, 1]} : vector<8x128xf32> to vector<8x32xf32>
    %319 = vector.extract_strided_slice %316 {offsets = [0, 64], sizes = [8, 32], strides = [1, 1]} : vector<8x128xf32> to vector<8x32xf32>
    %320 = vector.extract_strided_slice %315 {offsets = [0, 96], sizes = [8, 32], strides = [1, 1]} : vector<8x128xf32> to vector<8x32xf32>
    %321 = arith.mulf %318, %281 : vector<8x32xf32>
    %322 = arith.mulf %317, %319 : vector<8x32xf32>
    %323 = arith.addf %321, %322 : vector<8x32xf32>
    %324 = math.tanh %323 : vector<8x32xf32>
    %325 = arith.mulf %320, %324 : vector<8x32xf32>
    %326 = arith.truncf %325 : vector<8x32xf32> to vector<8x32xbf16>
    %cst_59 = arith.constant dense<0.000000e+00> : vector<8x256xf32>
    %327 = tpu.matmul %326, %3, %cst_59 {dimension_numbers = #tpu.dot_dimension_numbers<[1], [0], [0], [1], [0, 0, 1, 1], [], []>} : vector<8x32xbf16>, vector<32x256xbf16>, vector<8x256xf32> -> vector<8x256xf32>
    %c7_i32_60 = arith.constant 7 : i32
    %328 = vector.extract_strided_slice %327 {offsets = [0, 128], sizes = [8, 128], strides = [1, 1]} : vector<8x256xf32> to vector<8x128xf32>
    %cst_61 = arith.constant dense<0.000000e+00> : vector<8x128xf32>
    %329 = tpu.matmul %305, %4, %cst_61 {dimension_numbers = #tpu.dot_dimension_numbers<[1], [0], [0], [1], [0, 0, 1, 1], [], []>} : vector<8x32xbf16>, vector<32x128xbf16>, vector<8x128xf32> -> vector<8x128xf32>
    %330 = arith.addf %328, %329 : vector<8x128xf32>
    %331 = arith.addf %330, %7 : vector<8x128xf32>
    %332 = arith.negf %331 : vector<8x128xf32>
    %333 = math.exp %332 : vector<8x128xf32>
    %cst_62 = arith.constant 1.000000e+00 : f32
    %334 = vector.broadcast %cst_62 : f32 to vector<8x128xf32>
    %335 = arith.addf %334, %333 : vector<8x128xf32>
    %336 = arith.divf %334, %335 : vector<8x128xf32>
    %337 = math.tanh %331 : vector<8x128xf32>
    %338 = vector.extract_strided_slice %336 {offsets = [0, 0], sizes = [8, 32], strides = [1, 1]} : vector<8x128xf32> to vector<8x32xf32>
    %339 = vector.extract_strided_slice %336 {offsets = [0, 32], sizes = [8, 32], strides = [1, 1]} : vector<8x128xf32> to vector<8x32xf32>
    %340 = vector.extract_strided_slice %337 {offsets = [0, 64], sizes = [8, 32], strides = [1, 1]} : vector<8x128xf32> to vector<8x32xf32>
    %341 = vector.extract_strided_slice %336 {offsets = [0, 96], sizes = [8, 32], strides = [1, 1]} : vector<8x128xf32> to vector<8x32xf32>
    %342 = arith.mulf %339, %302 : vector<8x32xf32>
    %343 = arith.mulf %338, %340 : vector<8x32xf32>
    %344 = arith.addf %342, %343 : vector<8x32xf32>
    %345 = math.tanh %344 : vector<8x32xf32>
    %346 = arith.mulf %341, %345 : vector<8x32xf32>
    %347 = arith.truncf %346 : vector<8x32xf32> to vector<8x32xbf16>
    %c0_63 = arith.constant 0 : index
    %c0_64 = arith.constant 0 : index
    %348 = vector.load %arg11[%c0_63, %c0_64] : memref<8x256xf32, #tpu.memory_space<vmem>>, vector<8x256xf32>
    tpu.vector_store %arg11[%c0_63, %c0_64], %327 {strides = array<i32>} : memref<8x256xf32, #tpu.memory_space<vmem>>, vector<8x256xf32>,
    %c0_65 = arith.constant 0 : index
    %c0_66 = arith.constant 0 : index
    %349 = vector.load %arg12[%c0_65, %c0_66] : memref<8x32xf32, #tpu.memory_space<vmem>>, vector<8x32xf32>
    tpu.vector_store %arg12[%c0_65, %c0_66], %323 {strides = array<i32>} : memref<8x32xf32, #tpu.memory_space<vmem>>, vector<8x32xf32>,
    %350 = arith.extf %347 : vector<8x32xbf16> to vector<8x32xf32>
    %c0_67 = arith.constant 0 : index
    %c0_68 = arith.constant 0 : index
    %351 = vector.load %arg13[%c0_67, %c0_68] : memref<8x32xf32, #tpu.memory_space<vmem>>, vector<8x32xf32>
    tpu.vector_store %arg13[%c0_67, %c0_68], %350 {strides = array<i32>} : memref<8x32xf32, #tpu.memory_space<vmem>>, vector<8x32xf32>,
    %c0_69 = arith.constant 0 : index
    %c0_70 = arith.constant 0 : index
    %352 = vector.load %arg14[%c0_69, %c0_70] : memref<8x32xf32, #tpu.memory_space<vmem>>, vector<8x32xf32>
    tpu.vector_store %arg14[%c0_69, %c0_70], %344 {strides = array<i32>} : memref<8x32xf32, #tpu.memory_space<vmem>>, vector<8x32xf32>,
    %c0_i32_71 = arith.constant 0 : i32
    %353 = arith.cmpi eq, %arg1, %c0_i32_71 : i32
    %354 = arith.extui %353 : i1 to i32
    %c0_i32_72 = arith.constant 0 : i32
    %355 = arith.cmpi ne, %354, %c0_i32_72 : i32
    scf.if %355 {
      %c0_73 = arith.constant 0 : index
      %c0_74 = arith.constant 0 : index
      %356 = vector.load %arg6[%c0_73, %c0_74] : memref<32x32xbf16, #tpu.memory_space<vmem>>, vector<32x32xbf16>
      %cst_75 = arith.constant dense<0.000000e+00> : vector<8x32xf32>
      %357 = tpu.matmul %347, %356, %cst_75 {dimension_numbers = #tpu.dot_dimension_numbers<[1], [0], [0], [1], [0, 0, 1, 1], [], []>} : vector<8x32xbf16>, vector<32x32xbf16>, vector<8x32xf32> -> vector<8x32xf32>
      %c0_76 = arith.constant 0 : index
      %c0_77 = arith.constant 0 : index
      %358 = vector.load %arg7[%c0_76, %c0_77] : memref<1x32xf32, #tpu.memory_space<vmem>>, vector<1x32xf32>
      %359 = vector.broadcast %358 : vector<1x32xf32> to vector<8x32xf32>
      %360 = arith.addf %357, %359 : vector<8x32xf32>
      %cst_78 = arith.constant 0.000000e+00 : f32
      %361 = vector.broadcast %cst_78 : f32 to vector<8x32xf32>
      %362 = arith.maximumf %360, %361 : vector<8x32xf32>
      %c0_79 = arith.constant 0 : index
      %c0_80 = arith.constant 0 : index
      %363 = vector.load %arg8[%c0_79, %c0_80] : memref<1x32xbf16, #tpu.memory_space<vmem>>, vector<1x32xbf16>
      %364 = arith.extf %363 : vector<1x32xbf16> to vector<1x32xf32>
      %365 = arith.truncf %362 : vector<8x32xf32> to vector<8x32xbf16>
      %366 = arith.extf %365 : vector<8x32xbf16> to vector<8x32xf32>
      %367 = vector.broadcast %364 : vector<1x32xf32> to vector<8x32xf32>
      %368 = arith.mulf %366, %367 : vector<8x32xf32>
      %cst_81 = arith.constant dense<0.000000e+00> : vector<8xf32>
      %369 = vector.multi_reduction <add>, %368, %cst_81 [1] : vector<8x32xf32> to vector<8xf32>
      %370 = vector.shape_cast %369 : vector<8xf32> to vector<8x1xf32>
      %c0_82 = arith.constant 0 : index
      %c0_83 = arith.constant 0 : index
      %371 = vector.load %arg9[%c0_82, %c0_83] : memref<1x1xf32, #tpu.memory_space<vmem>>, vector<1x1xf32>
      %372 = vector.broadcast %371 : vector<1x1xf32> to vector<8x1xf32>
      %373 = arith.addf %370, %372 : vector<8x1xf32>
      %c0_84 = arith.constant 0 : index
      %c0_85 = arith.constant 0 : index
      %374 = vector.load %arg10[%c0_84, %c0_85] : memref<8x1xf32, #tpu.memory_space<vmem>>, vector<8x1xf32>
      tpu.vector_store %arg10[%c0_84, %c0_85], %373 {strides = array<i32>} : memref<8x1xf32, #tpu.memory_space<vmem>>, vector<8x1xf32>,
    } else {
    }
    return
  }
  func.func @transform_0(%arg0: i32, %arg1: i32) -> (i32, i32, i32) {
    %c0_i32 = arith.constant 0 : i32
    %c0_i32_0 = arith.constant 0 : i32
    return %arg1, %arg0, %c0_i32 : i32, i32, i32
  }
  func.func @transform_1(%arg0: i32, %arg1: i32) -> (i32, i32) {
    %c0_i32 = arith.constant 0 : i32
    %c0_i32_0 = arith.constant 0 : i32
    %c0_i32_1 = arith.constant 0 : i32
    return %c0_i32, %c0_i32_0 : i32, i32
  }
  func.func @transform_2(%arg0: i32, %arg1: i32) -> (i32, i32) {
    %c0_i32 = arith.constant 0 : i32
    %c0_i32_0 = arith.constant 0 : i32
    %c0_i32_1 = arith.constant 0 : i32
    return %c0_i32, %c0_i32_0 : i32, i32
  }
  func.func @transform_3(%arg0: i32, %arg1: i32) -> (i32, i32) {
    %c0_i32 = arith.constant 0 : i32
    %c0_i32_0 = arith.constant 0 : i32
    %c0_i32_1 = arith.constant 0 : i32
    return %c0_i32, %c0_i32_0 : i32, i32
  }
  func.func @transform_4(%arg0: i32, %arg1: i32) -> (i32, i32) {
    %c0_i32 = arith.constant 0 : i32
    %c0_i32_0 = arith.constant 0 : i32
    %c0_i32_1 = arith.constant 0 : i32
    return %c0_i32, %c0_i32_0 : i32, i32
  }
  func.func @transform_5(%arg0: i32, %arg1: i32) -> (i32, i32) {
    %c0_i32 = arith.constant 0 : i32
    %c0_i32_0 = arith.constant 0 : i32
    %c0_i32_1 = arith.constant 0 : i32
    return %c0_i32, %c0_i32_0 : i32, i32
  }
  func.func @transform_6(%arg0: i32, %arg1: i32) -> (i32, i32) {
    %c0_i32 = arith.constant 0 : i32
    %c0_i32_0 = arith.constant 0 : i32
    %c0_i32_1 = arith.constant 0 : i32
    return %c0_i32, %c0_i32_0 : i32, i32
  }
  func.func @transform_7(%arg0: i32, %arg1: i32) -> (i32, i32) {
    %c0_i32 = arith.constant 0 : i32
    %c0_i32_0 = arith.constant 0 : i32
    %c0_i32_1 = arith.constant 0 : i32
    return %c0_i32, %c0_i32_0 : i32, i32
  }
  func.func @transform_8(%arg0: i32, %arg1: i32) -> (i32, i32) {
    %c0_i32 = arith.constant 0 : i32
    %c0_i32_0 = arith.constant 0 : i32
    return %arg0, %c0_i32 : i32, i32
  }
}

</mosaic_0001>

<llo_original>
// kernel: tpu_custom_call.1
$region0: #{tpu_custom_call.1}
  #allocation0 [shape = 'u32[]', space=smem, size = 0x4, offset = 0x4, fixed_abs, tag = 'smem constant byte address 0x4 - core index']
  #allocation1 [shape = 'u32[144,128]{1,0:T(1,128)}', space=vmem, size = 0x12000, scoped, tag = 'internal scratch']
  #allocation2 [shape = 'f32[8,256]{1,0:T(8,128)}', space=vmem, size = 0x2000, scoped, tag = 'scratch operand']
  #allocation3 [shape = 'f32[8,32]{1,0:T(8,128)}', space=vmem, size = 0x1000, scoped, tag = 'scratch operand']
  #allocation4 [shape = 'f32[8,32]{1,0:T(8,128)}', space=vmem, size = 0x1000, scoped, tag = 'scratch operand']
  #allocation5 [shape = 'f32[8,32]{1,0:T(8,128)}', space=vmem, size = 0x1000, scoped, tag = 'scratch operand']
  #allocation6 [shape = 'f32[1,1]{1,0:T(1,128)S(1)}', space=vmem, size = 0x200, scoped, tag = 'scoped memory for tpu_custom_call.1']
  %s0 = inlined_call_operand.hbm [shape: f32[8,8,128], index: 0, kind: input, shape index: {}]
  %s1 = inlined_call_operand.hbm [shape: bf16[32,256], index: 1, kind: input, shape index: {}]
  %s2 = inlined_call_operand.hbm [shape: bf16[32,128], index: 2, kind: input, shape index: {}]
  %s3 = inlined_call_operand.vmem [shape: f32[1,128], index: 3, kind: input, shape index: {}]
  %s4 = inlined_call_operand.hbm [shape: bf16[32,32], index: 4, kind: input, shape index: {}]
  %s5 = inlined_call_operand.vmem [shape: f32[1,32], index: 5, kind: input, shape index: {}]
  %s6 = inlined_call_operand.vmem [shape: bf16[1,32], index: 6, kind: input, shape index: {}]
  %s7 = inlined_call_operand.<no memory space> [shape: f32[1,1], index: 7, kind: input, shape index: {}]
  %s8 = inlined_call_operand.vmem [shape: f32[8,1], index: 8, kind: output, shape index: {}]
  %s9 = sld [smem:[#allocation0]]
  $region66: #{tpu_custom_call.1} parent=0
    _
  %s11 = ssub.s32 1, %s9
  %s12 = scalar_select 0, %s11, %s9
  %v13 = vstv %s7
  %14 = vst [vmem:[#allocation6] sm:$0x1] %v13
  $region1: #{tpu_custom_call.1} parent=0
    #allocation7 [shape = 'u8[32768]{0}', space=vmem, size = 0x8000, scoped, tag = 'input window, operand 0, single buffered']
    #allocation8 [shape = 's32[1]{0}', space=sflag, size = 0x4, scoped, tag = 'scoped memory for tpu_custom_call.1']
    #allocation9 [shape = 'u8[16384]{0}', space=vmem, size = 0x4000, scoped, tag = 'input window, operand 1, single buffered']
    #allocation10 [shape = 's32[1]{0}', space=sflag, size = 0x4, scoped, tag = 'scoped memory for tpu_custom_call.1']
    #allocation11 [shape = 'u8[8192]{0}', space=vmem, size = 0x2000, scoped, tag = 'input window, operand 2, single buffered']
    #allocation12 [shape = 'u8[8192]{0}', space=vmem, size = 0x2000, scoped, tag = 'input window, operand 4, single buffered']
    #allocation13 [shape = 's32[1]{0}', space=sflag, size = 0x4, scoped, tag = 'scoped memory for tpu_custom_call.1']
    %15 = vsyncpa [#allocation8], 0
    %16 = vsyncpa [#allocation10], 0
    %17 = vsyncpa [#allocation13], 0
    // Predicated region
    $region2: #{tpu_custom_call.1} parent=1 // pred_check
      _
    $region3: #{tpu_custom_call.1} parent=1 // pred_check_branch
      %19 = sbr.rel (0) target = $region5
    $region4: #{tpu_custom_call.1} parent=1 // pred_region
      %s21 = ssub.s32 1024, 1024
      %22 = vsyncadd [#allocation8], %s21
      %s23 = sshll.u32 [#allocation7], 4
      %s24 = int_to_ptr.vmem [resolvable:$true] %s23
      %29 = dma.hbm_to_vmem [thread:$0]  %s0, 1024, %s24, [#allocation8], 128, 128, 8
    $region5: #{tpu_custom_call.1} parent=1 // pred_fallthru
      _
    // Predicated region
    $region6: #{tpu_custom_call.1} parent=1 // pred_check
      _
    $region7: #{tpu_custom_call.1} parent=1 // pred_check_branch
      %31 = sbr.rel (0) target = $region9
    $region8: #{tpu_custom_call.1} parent=1 // pred_region
      %s33 = ssub.s32 512, 512
      %34 = vsyncadd [#allocation10], %s33
      %s35 = sshll.u32 [#allocation9], 4
      %s36 = int_to_ptr.vmem [resolvable:$true] %s35
      %41 = dma.hbm_to_vmem [thread:$0]  %s1, 512, %s36, [#allocation10], 128, 128, 8
    $region9: #{tpu_custom_call.1} parent=1 // pred_fallthru
      _
    // Predicated region
    $region10: #{tpu_custom_call.1} parent=1 // pred_check
      _
    $region11: #{tpu_custom_call.1} parent=1 // pred_check_branch
      %43 = sbr.rel (0) target = $region13
    $region12: #{tpu_custom_call.1} parent=1 // pred_region
      %s45 = ssub.s32 256, 256
      %46 = vsyncadd [#allocation10], %s45
      %s47 = sshll.u32 [#allocation11], 4
      %s48 = int_to_ptr.vmem [resolvable:$true] %s47
      %53 = dma.hbm_to_vmem [thread:$0]  %s2, 256, %s48, [#allocation10], 64, 64, 4
    $region13: #{tpu_custom_call.1} parent=1 // pred_fallthru
      _
    // Predicated region
    $region14: #{tpu_custom_call.1} parent=1 // pred_check
      _
    $region15: #{tpu_custom_call.1} parent=1 // pred_check_branch
      %55 = sbr.rel (0) target = $region17
    $region16: #{tpu_custom_call.1} parent=1 // pred_region
      _
    $region17: #{tpu_custom_call.1} parent=1 // pred_fallthru
      _
    // Predicated region
    $region18: #{tpu_custom_call.1} parent=1 // pred_check
      _
    $region19: #{tpu_custom_call.1} parent=1 // pred_check_branch
      %57 = sbr.rel (0) target = $region21
    $region20: #{tpu_custom_call.1} parent=1 // pred_region
      %s59 = ssub.s32 256, 256
      %60 = vsyncadd [#allocation13], %s59
      %s61 = sshll.u32 [#allocation12], 4
      %s62 = int_to_ptr.vmem [resolvable:$true] %s61
      %67 = dma.hbm_to_vmem [thread:$0]  %s4, 256, %s62, [#allocation13], 64, 64, 4
    $region21: #{tpu_custom_call.1} parent=1 // pred_fallthru
      _
    // Predicated region
    $region22: #{tpu_custom_call.1} parent=1 // pred_check
      _
    $region23: #{tpu_custom_call.1} parent=1 // pred_check_branch
      %69 = sbr.rel (0) target = $region25
    $region24: #{tpu_custom_call.1} parent=1 // pred_region
      _
    $region25: #{tpu_custom_call.1} parent=1 // pred_fallthru
      _
    // Predicated region
    $region26: #{tpu_custom_call.1} parent=1 // pred_check
      _
    $region27: #{tpu_custom_call.1} parent=1 // pred_check_branch
      %71 = sbr.rel (0) target = $region29
    $region28: #{tpu_custom_call.1} parent=1 // pred_region
      _
    $region29: #{tpu_custom_call.1} parent=1 // pred_fallthru
      _
    // Predicated region
    $region30: #{tpu_custom_call.1} parent=1 // pred_check
      _
    $region31: #{tpu_custom_call.1} parent=1 // pred_check_branch
      %73 = sbr.rel (0) target = $region33
    $region32: #{tpu_custom_call.1} parent=1 // pred_region
      _
    $region33: #{tpu_custom_call.1} parent=1 // pred_fallthru
      _
    // Predicated region
    $region34: #{tpu_custom_call.1} parent=1 // pred_check
      _
    $region35: #{tpu_custom_call.1} parent=1 // pred_check_branch
      %75 = sbr.rel (0) target = $region37
    $region36: #{tpu_custom_call.1} parent=1 // pred_region
      %76 = dma.done [#allocation8], 1024
    $region37: #{tpu_custom_call.1} parent=1 // pred_fallthru
      _
    // Predicated region
    $region38: #{tpu_custom_call.1} parent=1 // pred_check
      _
    $region39: #{tpu_custom_call.1} parent=1 // pred_check_branch
      %78 = sbr.rel (0) target = $region41
    $region40: #{tpu_custom_call.1} parent=1 // pred_region
      %79 = dma.done [#allocation10], 512
    $region41: #{tpu_custom_call.1} parent=1 // pred_fallthru
      _
    // Predicated region
    $region42: #{tpu_custom_call.1} parent=1 // pred_check
      _
    $region43: #{tpu_custom_call.1} parent=1 // pred_check_branch
      %81 = sbr.rel (0) target = $region45
    $region44: #{tpu_custom_call.1} parent=1 // pred_region
      %82 = dma.done [#allocation10], 256
    $region45: #{tpu_custom_call.1} parent=1 // pred_fallthru
      _
    // Predicated region
    $region46: #{tpu_custom_call.1} parent=1 // pred_check
      _
    $region47: #{tpu_custom_call.1} parent=1 // pred_check_branch
      %84 = sbr.rel (0) target = $region49
    $region48: #{tpu_custom_call.1} parent=1 // pred_region
      %85 = dma.done [#allocation13], 256
    $region49: #{tpu_custom_call.1} parent=1 // pred_fallthru
      _
    %p87 = scmp.eq.s32.totalorder 0, 0
    // Predicated region
    $region50: #{tpu_custom_call.1} parent=1 // pred_check
      %p88 = pneg %p87
    $region51: #{tpu_custom_call.1} parent=1 // pred_check_branch
      %90 = sbr.rel (%p88) target = $region53
    $region52: #{tpu_custom_call.1} parent=1 // pred_region
      %91 = vst [vmem:[#allocation2] sm:$0xff] 0.0
      %92 = vst [vmem:[#allocation2 + $0x8] sm:$0xff] 0.0
      %vm93 = vcmask 261120
      %94 = vst.msk [vmem:[#allocation3] sm:$0xff] %vm93, 0.0
      %95 = vst.msk [vmem:[#allocation4] sm:$0xff] %vm93, 0.0
      %96 = vst.msk [vmem:[#allocation5] sm:$0xff] %vm93, 0.0
    $region53: #{tpu_custom_call.1} parent=1 // pred_fallthru
      _
    %v97 = vld [vmem:[#allocation9] sm:$0xff]
    %v98 = vld [vmem:[#allocation9 + $0x8] sm:$0xff]
    %v99 = vld [vmem:[#allocation9 + $0x10] sm:$0xff]
    %v100 = vld [vmem:[#allocation9 + $0x18] sm:$0xff]
    %v101 = vld [vmem:[#allocation11] sm:$0xf]
    %v102 = vld [vmem:[#allocation11 + $0x4] sm:$0xf]
    %v103 = vld [vmem:[#allocation11 + $0x8] sm:$0xf]
    %v104 = vld [vmem:[#allocation11 + $0xc] sm:$0xf]
    %v105 = vld [vmem:[%s3] sm:$0x1]
    %v107 = vlaneseq
    %v108 = vshrl.u32 %v107, 7
    %v109 = vsub.s32 0, %v108
    %v110 = vrot.slane %v105, %v109
    %v112 = vld [vmem:[#allocation2] sm:$0xff]
    %v113 = vld [vmem:[#allocation3] sm:$0xff]
    %v114 = vld [vmem:[#allocation4] sm:$0xff]
    %v115 = vpack.c.bf16 %v114, %v114
    %v116 = vld [vmem:[#allocation5] sm:$0xff]
    %v117 = vld [vmem:[#allocation7] sm:$0xff]
    %v118 = vadd.f32 %v117, %v112
    %v119 = vxor.u32 %v118, 2147483648
    %v120 = vmul.f32 %v119, 1.442695
    %v121 = vpow.pop %v120
    %v122 = vadd.f32 %v121, 1.0
    %v123 = vrcp.pop %v122
    %v124 = vmul.f32 1.0, %v123
    %v125 = vtanh.pop %v118
    %127 = vrot.lane.b32.xlu0 %v113, 32
    %v128 = vpop.permute.xlu0 %127
    %v130 = vmul.f32 %v124, %v128
    %132 = vrot.lane.b32.xlu0 %v125, 64
    %v133 = vpop.permute.xlu0 %132
    %v135 = vmul.f32 %v124, %v133
    %137 = vrot.lane.b32.xlu0 %v135, 32
    %v138 = vpop.permute.xlu0 %137
    %v140 = vadd.f32 %v130, %v138
    %v141 = vtanh.pop %v140
    %143 = vrot.lane.b32.xlu0 %v141, 64
    %v144 = vpop.permute.xlu0 %143
    %v146 = vmul.f32 %v124, %v144
    %v147 = vpack.c.bf16 %v146, %v146
    %149 = vrot.lane.b32.xlu0 %v147, 32
    %v150 = vpop.permute.xlu0 %149
    %v155 = vunpack.c.l.b16 %v97
    %v156 = vunpack.c.h.b16 %v97
    %v157 = vunpack.c.l.b16 %v98
    %v158 = vunpack.c.h.b16 %v98
    %v159 = vunpack.c.l.b16 %v99
    %v160 = vunpack.c.h.b16 %v99
    %v161 = vunpack.c.l.b16 %v100
    %v162 = vunpack.c.h.b16 %v100
    %v163 = vpack.c.b16 %v157, %v155
    %v164 = vpack.c.b16 %v158, %v156
    %v165 = vpack.c.b16 %v161, %v159
    %v166 = vpack.c.b16 %v162, %v160
    %vm171 = vcmask 261120
    %v173 = vsel %vm171, %v150, 0
    %175 = vmatprep.subr.bf16.mxu0 0
    %176 = vmatpush1.bf16.msra.mxu0 0
    %177 = vmatprep.subr.bf16.mxu0 0
    %178 = vmatpush1.bf16.msra.mxu0 0
    %179 = vmatprep.subr.bf16.mxu0 0
    %180 = vmatpush1.bf16.msra.mxu0 0
    %181 = vmatprep.subr.bf16.mxu0 0
    %182 = vmatpush1.bf16.msra.mxu0 0
    %183 = vmatprep.subr.bf16.mxu0 0
    %184 = vmatpush1.bf16.msra.mxu0 0
    %185 = vmatprep.subr.bf16.mxu0 0
    %186 = vmatpush1.bf16.msra.mxu0 0
    %187 = vmatprep.subr.bf16.mxu0 %v166
    %188 = vmatpush1.bf16.msra.mxu0 %v165
    %189 = vmatprep.subr.bf16.mxu0 %v164
    %190 = vmatpush1.bf16.msra.mxu0 %v163
    %191 = vmatprep.subr.bf16.mxu0 0
    %192 = vmatpush2.bf16.msra.mxu0 0
    %193 = vmatprep.subr.bf16.mxu0 0
    %194 = vmatpush2.bf16.msra.mxu0 0
    %195 = vmatprep.subr.bf16.mxu0 0
    %196 = vmatpush2.bf16.msra.mxu0 0
    %197 = vmatprep.subr.bf16.mxu0 0
    %198 = vmatpush2.bf16.msra.mxu0 0
    %199 = vmatprep.subr.bf16.mxu0 0
    %200 = vmatpush2.bf16.msra.mxu0 0
    %201 = vmatprep.subr.bf16.mxu0 0
    %202 = vmatpush2.bf16.msra.mxu0 0
    %203 = vmatprep.subr.bf16.mxu0 0
    %204 = vmatpush2.bf16.msra.mxu0 0
    %205 = vmatprep.subr.bf16.mxu0 0
    %206 = vmatpush2.bf16.msra.mxu0 0
    %207 = vmatprep.mubr.bf16.mxu0 0
    %208 = vmatmul.mubr.bf16.gmra.mxu0 %v173
    %v209 = vpop.f32.mrf.mxu0
    %v210 = vadd.f32 0.0, %v209
    %v211 = vpop.f32.mrf.mxu0
    %v212 = vadd.f32 0.0, %v211
    %v213 = vpop.f32.mrf.mxu0
    %v214 = vpop.f32.mrf.mxu0
    %215 = vdwg.mxu0
    %v220 = vunpack.c.l.b16 %v101
    %v221 = vunpack.c.l.b16 %v102
    %v222 = vunpack.c.l.b16 %v103
    %v223 = vunpack.c.l.b16 %v104
    %v224 = vpack.c.b16 %v221, %v220
    %v225 = vpack.c.b16 %v223, %v222
    %v229 = vsel %vm171, %v115, 0
    %231 = vmatprep.subr.bf16.mxu0 0
    %232 = vmatpush1.bf16.msra.mxu0 0
    %233 = vmatprep.subr.bf16.mxu0 0
    %234 = vmatpush1.bf16.msra.mxu0 0
    %235 = vmatprep.subr.bf16.mxu0 0
    %236 = vmatpush1.bf16.msra.mxu0 0
    %237 = vmatprep.subr.bf16.mxu0 0
    %238 = vmatpush1.bf16.msra.mxu0 0
    %239 = vmatprep.subr.bf16.mxu0 0
    %240 = vmatpush1.bf16.msra.mxu0 0
    %241 = vmatprep.subr.bf16.mxu0 0
    %242 = vmatpush1.bf16.msra.mxu0 0
    %243 = vmatprep.subr.bf16.mxu0 0
    %244 = vmatpush1.bf16.msra.mxu0 %v225
    %245 = vmatprep.subr.bf16.mxu0 0
    %246 = vmatpush1.bf16.msra.mxu0 %v224
    %247 = vmatprep.subr.bf16.mxu0 0
    %248 = vmatpush2.bf16.msra.mxu0 0
    %249 = vmatprep.subr.bf16.mxu0 0
    %250 = vmatpush2.bf16.msra.mxu0 0
    %251 = vmatprep.subr.bf16.mxu0 0
    %252 = vmatpush2.bf16.msra.mxu0 0
    %253 = vmatprep.subr.bf16.mxu0 0
    %254 = vmatpush2.bf16.msra.mxu0 0
    %255 = vmatprep.subr.bf16.mxu0 0
    %256 = vmatpush2.bf16.msra.mxu0 0
    %257 = vmatprep.subr.bf16.mxu0 0
    %258 = vmatpush2.bf16.msra.mxu0 0
    %259 = vmatprep.subr.bf16.mxu0 0
    %260 = vmatpush2.bf16.msra.mxu0 0
    %261 = vmatprep.subr.bf16.mxu0 0
    %262 = vmatpush2.bf16.msra.mxu0 0
    %263 = vmatprep.mubr.bf16.mxu0 0
    %264 = vmatmul.mubr.bf16.gmra.mxu0 %v229
    %v265 = vpop.f32.mrf.mxu0
    %v266 = vadd.f32 0.0, %v265
    %v267 = vpop.f32.mrf.mxu0
    %v268 = vpop.f32.mrf.mxu0
    %v269 = vpop.f32.mrf.mxu0
    %270 = vdwg.mxu0
    %v271 = vadd.f32 %v212, %v266
    %v272 = vadd.f32 %v271, %v110
    %v273 = vxor.u32 %v272, 2147483648
    %v274 = vmul.f32 %v273, 1.442695
    %v275 = vpow.pop %v274
    %v276 = vadd.f32 %v275, 1.0
    %v277 = vrcp.pop %v276
    %v278 = vmul.f32 1.0, %v277
    %v279 = vtanh.pop %v272
    %281 = vrot.lane.b32.xlu0 %v116, 32
    %v282 = vpop.permute.xlu0 %281
    %v284 = vmul.f32 %v278, %v282
    %286 = vrot.lane.b32.xlu0 %v279, 64
    %v287 = vpop.permute.xlu0 %286
    %v289 = vmul.f32 %v278, %v287
    %291 = vrot.lane.b32.xlu0 %v289, 32
    %v292 = vpop.permute.xlu0 %291
    %v294 = vadd.f32 %v284, %v292
    %v295 = vtanh.pop %v294
    %297 = vrot.lane.b32.xlu0 %v295, 64
    %v298 = vpop.permute.xlu0 %297
    %v300 = vmul.f32 %v278, %v298
    %v301 = vpack.c.bf16 %v300, %v300
    %s302 = scalar_lea.vmem [#allocation7], 8
    %v303 = vld [vmem:[%s302] sm:$0xff]
    %v304 = vadd.f32 %v303, %v210
    %v305 = vxor.u32 %v304, 2147483648
    %v306 = vmul.f32 %v305, 1.442695
    %v307 = vpow.pop %v306
    %v308 = vadd.f32 %v307, 1.0
    %v309 = vrcp.pop %v308
    %v310 = vmul.f32 1.0, %v309
    %v311 = vtanh.pop %v304
    %v312 = vmul.f32 %v310, %v140
    %314 = vrot.lane.b32.xlu0 %v311, 64
    %v315 = vpop.permute.xlu0 %314
    %v317 = vmul.f32 %v310, %v315
    %319 = vrot.lane.b32.xlu0 %v317, 32
    %v320 = vpop.permute.xlu0 %319
    %v322 = vadd.f32 %v312, %v320
    %v323 = vtanh.pop %v322
    %325 = vrot.lane.b32.xlu0 %v323, 64
    %v326 = vpop.permute.xlu0 %325
    %v328 = vmul.f32 %v310, %v326
    %v329 = vpack.c.bf16 %v328, %v328
    %331 = vrot.lane.b32.xlu0 %v329, 32
    %v332 = vpop.permute.xlu0 %331
    %v334 = vsel %vm171, %v332, 0
    %336 = vmatprep.subr.bf16.mxu0 0
    %337 = vmatpush1.bf16.msra.mxu0 0
    %338 = vmatprep.subr.bf16.mxu0 0
    %339 = vmatpush1.bf16.msra.mxu0 0
    %340 = vmatprep.subr.bf16.mxu0 0
    %341 = vmatpush1.bf16.msra.mxu0 0
    %342 = vmatprep.subr.bf16.mxu0 0
    %343 = vmatpush1.bf16.msra.mxu0 0
    %344 = vmatprep.subr.bf16.mxu0 0
    %345 = vmatpush1.bf16.msra.mxu0 0
    %346 = vmatprep.subr.bf16.mxu0 0
    %347 = vmatpush1.bf16.msra.mxu0 0
    %348 = vmatprep.subr.bf16.mxu0 %v166
    %349 = vmatpush1.bf16.msra.mxu0 %v165
    %350 = vmatprep.subr.bf16.mxu0 %v164
    %351 = vmatpush1.bf16.msra.mxu0 %v163
    %352 = vmatprep.subr.bf16.mxu0 0
    %353 = vmatpush2.bf16.msra.mxu0 0
    %354 = vmatprep.subr.bf16.mxu0 0
    %355 = vmatpush2.bf16.msra.mxu0 0
    %356 = vmatprep.subr.bf16.mxu0 0
    %357 = vmatpush2.bf16.msra.mxu0 0
    %358 = vmatprep.subr.bf16.mxu0 0
    %359 = vmatpush2.bf16.msra.mxu0 0
    %360 = vmatprep.subr.bf16.mxu0 0
    %361 = vmatpush2.bf16.msra.mxu0 0
    %362 = vmatprep.subr.bf16.mxu0 0
    %363 = vmatpush2.bf16.msra.mxu0 0
    %364 = vmatprep.subr.bf16.mxu0 0
    %365 = vmatpush2.bf16.msra.mxu0 0
    %366 = vmatprep.subr.bf16.mxu0 0
    %367 = vmatpush2.bf16.msra.mxu0 0
    %368 = vmatprep.mubr.bf16.mxu0 0
    %369 = vmatmul.mubr.bf16.gmra.mxu0 %v334
    %v370 = vpop.f32.mrf.mxu0
    %v371 = vadd.f32 0.0, %v370
    %v372 = vpop.f32.mrf.mxu0
    %v373 = vadd.f32 0.0, %v372
    %v374 = vpop.f32.mrf.mxu0
    %v375 = vpop.f32.mrf.mxu0
    %376 = vdwg.mxu0
    %378 = vrot.lane.b32.xlu0 %v301, 32
    %v379 = vpop.permute.xlu0 %378
    %v381 = vsel %vm171, %v379, 0
    %383 = vmatprep.subr.bf16.mxu0 0
    %384 = vmatpush1.bf16.msra.mxu0 0
    %385 = vmatprep.subr.bf16.mxu0 0
    %386 = vmatpush1.bf16.msra.mxu0 0
    %387 = vmatprep.subr.bf16.mxu0 0
    %388 = vmatpush1.bf16.msra.mxu0 0
    %389 = vmatprep.subr.bf16.mxu0 0
    %390 = vmatpush1.bf16.msra.mxu0 0
    %391 = vmatprep.subr.bf16.mxu0 0
    %392 = vmatpush1.bf16.msra.mxu0 0
    %393 = vmatprep.subr.bf16.mxu0 0
    %394 = vmatpush1.bf16.msra.mxu0 0
    %395 = vmatprep.subr.bf16.mxu0 0
    %396 = vmatpush1.bf16.msra.mxu0 %v225
    %397 = vmatprep.subr.bf16.mxu0 0
    %398 = vmatpush1.bf16.msra.mxu0 %v224
    %399 = vmatprep.subr.bf16.mxu0 0
    %400 = vmatpush2.bf16.msra.mxu0 0
    %401 = vmatprep.subr.bf16.mxu0 0
    %402 = vmatpush2.bf16.msra.mxu0 0
    %403 = vmatprep.subr.bf16.mxu0 0
    %404 = vmatpush2.bf16.msra.mxu0 0
    %405 = vmatprep.subr.bf16.mxu0 0
    %406 = vmatpush2.bf16.msra.mxu0 0
    %407 = vmatprep.subr.bf16.mxu0 0
    %408 = vmatpush2.bf16.msra.mxu0 0
    %409 = vmatprep.subr.bf16.mxu0 0
    %410 = vmatpush2.bf16.msra.mxu0 0
    %411 = vmatprep.subr.bf16.mxu0 0
    %412 = vmatpush2.bf16.msra.mxu0 0
    %413 = vmatprep.subr.bf16.mxu0 0
    %414 = vmatpush2.bf16.msra.mxu0 0
    %415 = vmatprep.mubr.bf16.mxu0 0
    %416 = vmatmul.mubr.bf16.gmra.mxu0 %v381
    %v417 = vpop.f32.mrf.mxu0
    %v418 = vadd.f32 0.0, %v417
    %v419 = vpop.f32.mrf.mxu0
    %v420 = vpop.f32.mrf.mxu0
    %v421 = vpop.f32.mrf.mxu0
    %422 = vdwg.mxu0
    %v423 = vadd.f32 %v373, %v418
    %v424 = vadd.f32 %v423, %v110
    %v425 = vxor.u32 %v424, 2147483648
    %v426 = vmul.f32 %v425, 1.442695
    %v427 = vpow.pop %v426
    %v428 = vadd.f32 %v427, 1.0
    %v429 = vrcp.pop %v428
    %v430 = vmul.f32 1.0, %v429
    %v431 = vtanh.pop %v424
    %v432 = vmul.f32 %v430, %v294
    %434 = vrot.lane.b32.xlu0 %v431, 64
    %v435 = vpop.permute.xlu0 %434
    %v437 = vmul.f32 %v430, %v435
    %439 = vrot.lane.b32.xlu0 %v437, 32
    %v440 = vpop.permute.xlu0 %439
    %v442 = vadd.f32 %v432, %v440
    %v443 = vtanh.pop %v442
    %445 = vrot.lane.b32.xlu0 %v443, 64
    %v446 = vpop.permute.xlu0 %445
    %v448 = vmul.f32 %v430, %v446
    %v449 = vpack.c.bf16 %v448, %v448
    %s450 = scalar_lea.vmem [#allocation7], 16
    %v451 = vld [vmem:[%s450] sm:$0xff]
    %v452 = vadd.f32 %v451, %v371
    %v453 = vxor.u32 %v452, 2147483648
    %v454 = vmul.f32 %v453, 1.442695
    %v455 = vpow.pop %v454
    %v456 = vadd.f32 %v455, 1.0
    %v457 = vrcp.pop %v456
    %v458 = vmul.f32 1.0, %v457
    %v459 = vtanh.pop %v452
    %v460 = vmul.f32 %v458, %v322
    %462 = vrot.lane.b32.xlu0 %v459, 64
    %v463 = vpop.permute.xlu0 %462
    %v465 = vmul.f32 %v458, %v463
    %467 = vrot.lane.b32.xlu0 %v465, 32
    %v468 = vpop.permute.xlu0 %467
    %v470 = vadd.f32 %v460, %v468
    %v471 = vtanh.pop %v470
    %473 = vrot.lane.b32.xlu0 %v471, 64
    %v474 = vpop.permute.xlu0 %473
    %v476 = vmul.f32 %v458, %v474
    %v477 = vpack.c.bf16 %v476, %v476
    %479 = vrot.lane.b32.xlu0 %v477, 32
    %v480 = vpop.permute.xlu0 %479
    %v482 = vsel %vm171, %v480, 0
    %484 = vmatprep.subr.bf16.mxu0 0
    %485 = vmatpush1.bf16.msra.mxu0 0
    %486 = vmatprep.subr.bf16.mxu0 0
    %487 = vmatpush1.bf16.msra.mxu0 0
    %488 = vmatprep.subr.bf16.mxu0 0
    %489 = vmatpush1.bf16.msra.mxu0 0
    %490 = vmatprep.subr.bf16.mxu0 0
    %491 = vmatpush1.bf16.msra.mxu0 0
    %492 = vmatprep.subr.bf16.mxu0 0
    %493 = vmatpush1.bf16.msra.mxu0 0
    %494 = vmatprep.subr.bf16.mxu0 0
    %495 = vmatpush1.bf16.msra.mxu0 0
    %496 = vmatprep.subr.bf16.mxu0 %v166
    %497 = vmatpush1.bf16.msra.mxu0 %v165
    %498 = vmatprep.subr.bf16.mxu0 %v164
    %499 = vmatpush1.bf16.msra.mxu0 %v163
    %500 = vmatprep.subr.bf16.mxu0 0
    %501 = vmatpush2.bf16.msra.mxu0 0
    %502 = vmatprep.subr.bf16.mxu0 0
    %503 = vmatpush2.bf16.msra.mxu0 0
    %504 = vmatprep.subr.bf16.mxu0 0
    %505 = vmatpush2.bf16.msra.mxu0 0
    %506 = vmatprep.subr.bf16.mxu0 0
    %507 = vmatpush2.bf16.msra.mxu0 0
    %508 = vmatprep.subr.bf16.mxu0 0
    %509 = vmatpush2.bf16.msra.mxu0 0
    %510 = vmatprep.subr.bf16.mxu0 0
    %511 = vmatpush2.bf16.msra.mxu0 0
    %512 = vmatprep.subr.bf16.mxu0 0
    %513 = vmatpush2.bf16.msra.mxu0 0
    %514 = vmatprep.subr.bf16.mxu0 0
    %515 = vmatpush2.bf16.msra.mxu0 0
    %516 = vmatprep.mubr.bf16.mxu0 0
    %517 = vmatmul.mubr.bf16.gmra.mxu0 %v482
    %v518 = vpop.f32.mrf.mxu0
    %v519 = vadd.f32 0.0, %v518
    %v520 = vpop.f32.mrf.mxu0
    %v521 = vadd.f32 0.0, %v520
    %v522 = vpop.f32.mrf.mxu0
    %v523 = vpop.f32.mrf.mxu0
    %524 = vdwg.mxu0
    %526 = vrot.lane.b32.xlu0 %v449, 32
    %v527 = vpop.permute.xlu0 %526
    %v529 = vsel %vm171, %v527, 0
    %531 = vmatprep.subr.bf16.mxu0 0
    %532 = vmatpush1.bf16.msra.mxu0 0
    %533 = vmatprep.subr.bf16.mxu0 0
    %534 = vmatpush1.bf16.msra.mxu0 0
    %535 = vmatprep.subr.bf16.mxu0 0
    %536 = vmatpush1.bf16.msra.mxu0 0
    %537 = vmatprep.subr.bf16.mxu0 0
    %538 = vmatpush1.bf16.msra.mxu0 0
    %539 = vmatprep.subr.bf16.mxu0 0
    %540 = vmatpush1.bf16.msra.mxu0 0
    %541 = vmatprep.subr.bf16.mxu0 0
    %542 = vmatpush1.bf16.msra.mxu0 0
    %543 = vmatprep.subr.bf16.mxu0 0
    %544 = vmatpush1.bf16.msra.mxu0 %v225
    %545 = vmatprep.subr.bf16.mxu0 0
    %546 = vmatpush1.bf16.msra.mxu0 %v224
    %547 = vmatprep.subr.bf16.mxu0 0
    %548 = vmatpush2.bf16.msra.mxu0 0
    %549 = vmatprep.subr.bf16.mxu0 0
    %550 = vmatpush2.bf16.msra.mxu0 0
    %551 = vmatprep.subr.bf16.mxu0 0
    %552 = vmatpush2.bf16.msra.mxu0 0
    %553 = vmatprep.subr.bf16.mxu0 0
    %554 = vmatpush2.bf16.msra.mxu0 0
    %555 = vmatprep.subr.bf16.mxu0 0
    %556 = vmatpush2.bf16.msra.mxu0 0
    %557 = vmatprep.subr.bf16.mxu0 0
    %558 = vmatpush2.bf16.msra.mxu0 0
    %559 = vmatprep.subr.bf16.mxu0 0
    %560 = vmatpush2.bf16.msra.mxu0 0
    %561 = vmatprep.subr.bf16.mxu0 0
    %562 = vmatpush2.bf16.msra.mxu0 0
    %563 = vmatprep.mubr.bf16.mxu0 0
    %564 = vmatmul.mubr.bf16.gmra.mxu0 %v529
    %v565 = vpop.f32.mrf.mxu0
    %v566 = vadd.f32 0.0, %v565
    %v567 = vpop.f32.mrf.mxu0
    %v568 = vpop.f32.mrf.mxu0
    %v569 = vpop.f32.mrf.mxu0
    %570 = vdwg.mxu0
    %v571 = vadd.f32 %v521, %v566
    %v572 = vadd.f32 %v571, %v110
    %v573 = vxor.u32 %v572, 2147483648
    %v574 = vmul.f32 %v573, 1.442695
    %v575 = vpow.pop %v574
    %v576 = vadd.f32 %v575, 1.0
    %v577 = vrcp.pop %v576
    %v578 = vmul.f32 1.0, %v577
    %v579 = vtanh.pop %v572
    %v580 = vmul.f32 %v578, %v442
    %582 = vrot.lane.b32.xlu0 %v579, 64
    %v583 = vpop.permute.xlu0 %582
    %v585 = vmul.f32 %v578, %v583
    %587 = vrot.lane.b32.xlu0 %v585, 32
    %v588 = vpop.permute.xlu0 %587
    %v590 = vadd.f32 %v580, %v588
    %v591 = vtanh.pop %v590
    %593 = vrot.lane.b32.xlu0 %v591, 64
    %v594 = vpop.permute.xlu0 %593
    %v596 = vmul.f32 %v578, %v594
    %v597 = vpack.c.bf16 %v596, %v596
    %s598 = scalar_lea.vmem [#allocation7], 24
    %v599 = vld [vmem:[%s598] sm:$0xff]
    %v600 = vadd.f32 %v599, %v519
    %v601 = vxor.u32 %v600, 2147483648
    %v602 = vmul.f32 %v601, 1.442695
    %v603 = vpow.pop %v602
    %v604 = vadd.f32 %v603, 1.0
    %v605 = vrcp.pop %v604
    %v606 = vmul.f32 1.0, %v605
    %v607 = vtanh.pop %v600
    %v608 = vmul.f32 %v606, %v470
    %610 = vrot.lane.b32.xlu0 %v607, 64
    %v611 = vpop.permute.xlu0 %610
    %v613 = vmul.f32 %v606, %v611
    %615 = vrot.lane.b32.xlu0 %v613, 32
    %v616 = vpop.permute.xlu0 %615
    %v618 = vadd.f32 %v608, %v616
    %v619 = vtanh.pop %v618
    %621 = vrot.lane.b32.xlu0 %v619, 64
    %v622 = vpop.permute.xlu0 %621
    %v624 = vmul.f32 %v606, %v622
    %v625 = vpack.c.bf16 %v624, %v624
    %627 = vrot.lane.b32.xlu0 %v625, 32
    %v628 = vpop.permute.xlu0 %627
    %v630 = vsel %vm171, %v628, 0
    %632 = vmatprep.subr.bf16.mxu0 0
    %633 = vmatpush1.bf16.msra.mxu0 0
    %634 = vmatprep.subr.bf16.mxu0 0
    %635 = vmatpush1.bf16.msra.mxu0 0
    %636 = vmatprep.subr.bf16.mxu0 0
    %637 = vmatpush1.bf16.msra.mxu0 0
    %638 = vmatprep.subr.bf16.mxu0 0
    %639 = vmatpush1.bf16.msra.mxu0 0
    %640 = vmatprep.subr.bf16.mxu0 0
    %641 = vmatpush1.bf16.msra.mxu0 0
    %642 = vmatprep.subr.bf16.mxu0 0
    %643 = vmatpush1.bf16.msra.mxu0 0
    %644 = vmatprep.subr.bf16.mxu0 %v166
    %645 = vmatpush1.bf16.msra.mxu0 %v165
    %646 = vmatprep.subr.bf16.mxu0 %v164
    %647 = vmatpush1.bf16.msra.mxu0 %v163
    %648 = vmatprep.subr.bf16.mxu0 0
    %649 = vmatpush2.bf16.msra.mxu0 0
    %650 = vmatprep.subr.bf16.mxu0 0
    %651 = vmatpush2.bf16.msra.mxu0 0
    %652 = vmatprep.subr.bf16.mxu0 0
    %653 = vmatpush2.bf16.msra.mxu0 0
    %654 = vmatprep.subr.bf16.mxu0 0
    %655 = vmatpush2.bf16.msra.mxu0 0
    %656 = vmatprep.subr.bf16.mxu0 0
    %657 = vmatpush2.bf16.msra.mxu0 0
    %658 = vmatprep.subr.bf16.mxu0 0
    %659 = vmatpush2.bf16.msra.mxu0 0
    %660 = vmatprep.subr.bf16.mxu0 0
    %661 = vmatpush2.bf16.msra.mxu0 0
    %662 = vmatprep.subr.bf16.mxu0 0
    %663 = vmatpush2.bf16.msra.mxu0 0
    %664 = vmatprep.mubr.bf16.mxu0 0
    %665 = vmatmul.mubr.bf16.gmra.mxu0 %v630
    %v666 = vpop.f32.mrf.mxu0
    %v667 = vadd.f32 0.0, %v666
    %v668 = vpop.f32.mrf.mxu0
    %v669 = vadd.f32 0.0, %v668
    %v670 = vpop.f32.mrf.mxu0
    %v671 = vpop.f32.mrf.mxu0
    %672 = vdwg.mxu0
    %674 = vrot.lane.b32.xlu0 %v597, 32
    %v675 = vpop.permute.xlu0 %674
    %v677 = vsel %vm171, %v675, 0
    %679 = vmatprep.subr.bf16.mxu0 0
    %680 = vmatpush1.bf16.msra.mxu0 0
    %681 = vmatprep.subr.bf16.mxu0 0
    %682 = vmatpush1.bf16.msra.mxu0 0
    %683 = vmatprep.subr.bf16.mxu0 0
    %684 = vmatpush1.bf16.msra.mxu0 0
    %685 = vmatprep.subr.bf16.mxu0 0
    %686 = vmatpush1.bf16.msra.mxu0 0
    %687 = vmatprep.subr.bf16.mxu0 0
    %688 = vmatpush1.bf16.msra.mxu0 0
    %689 = vmatprep.subr.bf16.mxu0 0
    %690 = vmatpush1.bf16.msra.mxu0 0
    %691 = vmatprep.subr.bf16.mxu0 0
    %692 = vmatpush1.bf16.msra.mxu0 %v225
    %693 = vmatprep.subr.bf16.mxu0 0
    %694 = vmatpush1.bf16.msra.mxu0 %v224
    %695 = vmatprep.subr.bf16.mxu0 0
    %696 = vmatpush2.bf16.msra.mxu0 0
    %697 = vmatprep.subr.bf16.mxu0 0
    %698 = vmatpush2.bf16.msra.mxu0 0
    %699 = vmatprep.subr.bf16.mxu0 0
    %700 = vmatpush2.bf16.msra.mxu0 0
    %701 = vmatprep.subr.bf16.mxu0 0
    %702 = vmatpush2.bf16.msra.mxu0 0
    %703 = vmatprep.subr.bf16.mxu0 0
    %704 = vmatpush2.bf16.msra.mxu0 0
    %705 = vmatprep.subr.bf16.mxu0 0
    %706 = vmatpush2.bf16.msra.mxu0 0
    %707 = vmatprep.subr.bf16.mxu0 0
    %708 = vmatpush2.bf16.msra.mxu0 0
    %709 = vmatprep.subr.bf16.mxu0 0
    %710 = vmatpush2.bf16.msra.mxu0 0
    %711 = vmatprep.mubr.bf16.mxu0 0
    %712 = vmatmul.mubr.bf16.gmra.mxu0 %v677
    %v713 = vpop.f32.mrf.mxu0
    %v714 = vadd.f32 0.0, %v713
    %v715 = vpop.f32.mrf.mxu0
    %v716 = vpop.f32.mrf.mxu0
    %v717 = vpop.f32.mrf.mxu0
    %718 = vdwg.mxu0
    %v719 = vadd.f32 %v669, %v714
    %v720 = vadd.f32 %v719, %v110
    %v721 = vxor.u32 %v720, 2147483648
    %v722 = vmul.f32 %v721, 1.442695
    %v723 = vpow.pop %v722
    %v724 = vadd.f32 %v723, 1.0
    %v725 = vrcp.pop %v724
    %v726 = vmul.f32 1.0, %v725
    %v727 = vtanh.pop %v720
    %v728 = vmul.f32 %v726, %v590
    %730 = vrot.lane.b32.xlu0 %v727, 64
    %v731 = vpop.permute.xlu0 %730
    %v733 = vmul.f32 %v726, %v731
    %735 = vrot.lane.b32.xlu0 %v733, 32
    %v736 = vpop.permute.xlu0 %735
    %v738 = vadd.f32 %v728, %v736
    %v739 = vtanh.pop %v738
    %741 = vrot.lane.b32.xlu0 %v739, 64
    %v742 = vpop.permute.xlu0 %741
    %v744 = vmul.f32 %v726, %v742
    %v745 = vpack.c.bf16 %v744, %v744
    %s746 = scalar_lea.vmem [#allocation7], 32
    %v747 = vld [vmem:[%s746] sm:$0xff]
    %v748 = vadd.f32 %v747, %v667
    %v749 = vxor.u32 %v748, 2147483648
    %v750 = vmul.f32 %v749, 1.442695
    %v751 = vpow.pop %v750
    %v752 = vadd.f32 %v751, 1.0
    %v753 = vrcp.pop %v752
    %v754 = vmul.f32 1.0, %v753
    %v755 = vtanh.pop %v748
    %v756 = vmul.f32 %v754, %v618
    %758 = vrot.lane.b32.xlu0 %v755, 64
    %v759 = vpop.permute.xlu0 %758
    %v761 = vmul.f32 %v754, %v759
    %763 = vrot.lane.b32.xlu0 %v761, 32
    %v764 = vpop.permute.xlu0 %763
    %v766 = vadd.f32 %v756, %v764
    %v767 = vtanh.pop %v766
    %769 = vrot.lane.b32.xlu0 %v767, 64
    %v770 = vpop.permute.xlu0 %769
    %v772 = vmul.f32 %v754, %v770
    %v773 = vpack.c.bf16 %v772, %v772
    %775 = vrot.lane.b32.xlu0 %v773, 32
    %v776 = vpop.permute.xlu0 %775
    %v778 = vsel %vm171, %v776, 0
    %780 = vmatprep.subr.bf16.mxu0 0
    %781 = vmatpush1.bf16.msra.mxu0 0
    %782 = vmatprep.subr.bf16.mxu0 0
    %783 = vmatpush1.bf16.msra.mxu0 0
    %784 = vmatprep.subr.bf16.mxu0 0
    %785 = vmatpush1.bf16.msra.mxu0 0
    %786 = vmatprep.subr.bf16.mxu0 0
    %787 = vmatpush1.bf16.msra.mxu0 0
    %788 = vmatprep.subr.bf16.mxu0 0
    %789 = vmatpush1.bf16.msra.mxu0 0
    %790 = vmatprep.subr.bf16.mxu0 0
    %791 = vmatpush1.bf16.msra.mxu0 0
    %792 = vmatprep.subr.bf16.mxu0 %v166
    %793 = vmatpush1.bf16.msra.mxu0 %v165
    %794 = vmatprep.subr.bf16.mxu0 %v164
    %795 = vmatpush1.bf16.msra.mxu0 %v163
    %796 = vmatprep.subr.bf16.mxu0 0
    %797 = vmatpush2.bf16.msra.mxu0 0
    %798 = vmatprep.subr.bf16.mxu0 0
    %799 = vmatpush2.bf16.msra.mxu0 0
    %800 = vmatprep.subr.bf16.mxu0 0
    %801 = vmatpush2.bf16.msra.mxu0 0
    %802 = vmatprep.subr.bf16.mxu0 0
    %803 = vmatpush2.bf16.msra.mxu0 0
    %804 = vmatprep.subr.bf16.mxu0 0
    %805 = vmatpush2.bf16.msra.mxu0 0
    %806 = vmatprep.subr.bf16.mxu0 0
    %807 = vmatpush2.bf16.msra.mxu0 0
    %808 = vmatprep.subr.bf16.mxu0 0
    %809 = vmatpush2.bf16.msra.mxu0 0
    %810 = vmatprep.subr.bf16.mxu0 0
    %811 = vmatpush2.bf16.msra.mxu0 0
    %812 = vmatprep.mubr.bf16.mxu0 0
    %813 = vmatmul.mubr.bf16.gmra.mxu0 %v778
    %v814 = vpop.f32.mrf.mxu0
    %v815 = vadd.f32 0.0, %v814
    %v816 = vpop.f32.mrf.mxu0
    %v817 = vadd.f32 0.0, %v816
    %v818 = vpop.f32.mrf.mxu0
    %v819 = vpop.f32.mrf.mxu0
    %820 = vdwg.mxu0
    %822 = vrot.lane.b32.xlu0 %v745, 32
    %v823 = vpop.permute.xlu0 %822
    %v825 = vsel %vm171, %v823, 0
    %827 = vmatprep.subr.bf16.mxu0 0
    %828 = vmatpush1.bf16.msra.mxu0 0
    %829 = vmatprep.subr.bf16.mxu0 0
    %830 = vmatpush1.bf16.msra.mxu0 0
    %831 = vmatprep.subr.bf16.mxu0 0
    %832 = vmatpush1.bf16.msra.mxu0 0
    %833 = vmatprep.subr.bf16.mxu0 0
    %834 = vmatpush1.bf16.msra.mxu0 0
    %835 = vmatprep.subr.bf16.mxu0 0
    %836 = vmatpush1.bf16.msra.mxu0 0
    %837 = vmatprep.subr.bf16.mxu0 0
    %838 = vmatpush1.bf16.msra.mxu0 0
    %839 = vmatprep.subr.bf16.mxu0 0
    %840 = vmatpush1.bf16.msra.mxu0 %v225
    %841 = vmatprep.subr.bf16.mxu0 0
    %842 = vmatpush1.bf16.msra.mxu0 %v224
    %843 = vmatprep.subr.bf16.mxu0 0
    %844 = vmatpush2.bf16.msra.mxu0 0
    %845 = vmatprep.subr.bf16.mxu0 0
    %846 = vmatpush2.bf16.msra.mxu0 0
    %847 = vmatprep.subr.bf16.mxu0 0
    %848 = vmatpush2.bf16.msra.mxu0 0
    %849 = vmatprep.subr.bf16.mxu0 0
    %850 = vmatpush2.bf16.msra.mxu0 0
    %851 = vmatprep.subr.bf16.mxu0 0
    %852 = vmatpush2.bf16.msra.mxu0 0
    %853 = vmatprep.subr.bf16.mxu0 0
    %854 = vmatpush2.bf16.msra.mxu0 0
    %855 = vmatprep.subr.bf16.mxu0 0
    %856 = vmatpush2.bf16.msra.mxu0 0
    %857 = vmatprep.subr.bf16.mxu0 0
    %858 = vmatpush2.bf16.msra.mxu0 0
    %859 = vmatprep.mubr.bf16.mxu0 0
    %860 = vmatmul.mubr.bf16.gmra.mxu0 %v825
    %v861 = vpop.f32.mrf.mxu0
    %v862 = vadd.f32 0.0, %v861
    %v863 = vpop.f32.mrf.mxu0
    %v864 = vpop.f32.mrf.mxu0
    %v865 = vpop.f32.mrf.mxu0
    %866 = vdwg.mxu0
    %v867 = vadd.f32 %v817, %v862
    %v868 = vadd.f32 %v867, %v110
    %v869 = vxor.u32 %v868, 2147483648
    %v870 = vmul.f32 %v869, 1.442695
    %v871 = vpow.pop %v870
    %v872 = vadd.f32 %v871, 1.0
    %v873 = vrcp.pop %v872
    %v874 = vmul.f32 1.0, %v873
    %v875 = vtanh.pop %v868
    %v876 = vmul.f32 %v874, %v738
    %878 = vrot.lane.b32.xlu0 %v875, 64
    %v879 = vpop.permute.xlu0 %878
    %v881 = vmul.f32 %v874, %v879
    %883 = vrot.lane.b32.xlu0 %v881, 32
    %v884 = vpop.permute.xlu0 %883
    %v886 = vadd.f32 %v876, %v884
    %v887 = vtanh.pop %v886
    %889 = vrot.lane.b32.xlu0 %v887, 64
    %v890 = vpop.permute.xlu0 %889
    %v892 = vmul.f32 %v874, %v890
    %v893 = vpack.c.bf16 %v892, %v892
    %s894 = scalar_lea.vmem [#allocation7], 40
    %v895 = vld [vmem:[%s894] sm:$0xff]
    %v896 = vadd.f32 %v895, %v815
    %v897 = vxor.u32 %v896, 2147483648
    %v898 = vmul.f32 %v897, 1.442695
    %v899 = vpow.pop %v898
    %v900 = vadd.f32 %v899, 1.0
    %v901 = vrcp.pop %v900
    %v902 = vmul.f32 1.0, %v901
    %v903 = vtanh.pop %v896
    %v904 = vmul.f32 %v902, %v766
    %906 = vrot.lane.b32.xlu0 %v903, 64
    %v907 = vpop.permute.xlu0 %906
    %v909 = vmul.f32 %v902, %v907
    %911 = vrot.lane.b32.xlu0 %v909, 32
    %v912 = vpop.permute.xlu0 %911
    %v914 = vadd.f32 %v904, %v912
    %v915 = vtanh.pop %v914
    %917 = vrot.lane.b32.xlu0 %v915, 64
    %v918 = vpop.permute.xlu0 %917
    %v920 = vmul.f32 %v902, %v918
    %v921 = vpack.c.bf16 %v920, %v920
    %923 = vrot.lane.b32.xlu0 %v921, 32
    %v924 = vpop.permute.xlu0 %923
    %v926 = vsel %vm171, %v924, 0
    %928 = vmatprep.subr.bf16.mxu0 0
    %929 = vmatpush1.bf16.msra.mxu0 0
    %930 = vmatprep.subr.bf16.mxu0 0
    %931 = vmatpush1.bf16.msra.mxu0 0
    %932 = vmatprep.subr.bf16.mxu0 0
    %933 = vmatpush1.bf16.msra.mxu0 0
    %934 = vmatprep.subr.bf16.mxu0 0
    %935 = vmatpush1.bf16.msra.mxu0 0
    %936 = vmatprep.subr.bf16.mxu0 0
    %937 = vmatpush1.bf16.msra.mxu0 0
    %938 = vmatprep.subr.bf16.mxu0 0
    %939 = vmatpush1.bf16.msra.mxu0 0
    %940 = vmatprep.subr.bf16.mxu0 %v166
    %941 = vmatpush1.bf16.msra.mxu0 %v165
    %942 = vmatprep.subr.bf16.mxu0 %v164
    %943 = vmatpush1.bf16.msra.mxu0 %v163
    %944 = vmatprep.subr.bf16.mxu0 0
    %945 = vmatpush2.bf16.msra.mxu0 0
    %946 = vmatprep.subr.bf16.mxu0 0
    %947 = vmatpush2.bf16.msra.mxu0 0
    %948 = vmatprep.subr.bf16.mxu0 0
    %949 = vmatpush2.bf16.msra.mxu0 0
    %950 = vmatprep.subr.bf16.mxu0 0
    %951 = vmatpush2.bf16.msra.mxu0 0
    %952 = vmatprep.subr.bf16.mxu0 0
    %953 = vmatpush2.bf16.msra.mxu0 0
    %954 = vmatprep.subr.bf16.mxu0 0
    %955 = vmatpush2.bf16.msra.mxu0 0
    %956 = vmatprep.subr.bf16.mxu0 0
    %957 = vmatpush2.bf16.msra.mxu0 0
    %958 = vmatprep.subr.bf16.mxu0 0
    %959 = vmatpush2.bf16.msra.mxu0 0
    %960 = vmatprep.mubr.bf16.mxu0 0
    %961 = vmatmul.mubr.bf16.gmra.mxu0 %v926
    %v962 = vpop.f32.mrf.mxu0
    %v963 = vadd.f32 0.0, %v962
    %v964 = vpop.f32.mrf.mxu0
    %v965 = vadd.f32 0.0, %v964
    %v966 = vpop.f32.mrf.mxu0
    %v967 = vpop.f32.mrf.mxu0
    %968 = vdwg.mxu0
    %970 = vrot.lane.b32.xlu0 %v893, 32
    %v971 = vpop.permute.xlu0 %970
    %v973 = vsel %vm171, %v971, 0
    %975 = vmatprep.subr.bf16.mxu0 0
    %976 = vmatpush1.bf16.msra.mxu0 0
    %977 = vmatprep.subr.bf16.mxu0 0
    %978 = vmatpush1.bf16.msra.mxu0 0
    %979 = vmatprep.subr.bf16.mxu0 0
    %980 = vmatpush1.bf16.msra.mxu0 0
    %981 = vmatprep.subr.bf16.mxu0 0
    %982 = vmatpush1.bf16.msra.mxu0 0
    %983 = vmatprep.subr.bf16.mxu0 0
    %984 = vmatpush1.bf16.msra.mxu0 0
    %985 = vmatprep.subr.bf16.mxu0 0
    %986 = vmatpush1.bf16.msra.mxu0 0
    %987 = vmatprep.subr.bf16.mxu0 0
    %988 = vmatpush1.bf16.msra.mxu0 %v225
    %989 = vmatprep.subr.bf16.mxu0 0
    %990 = vmatpush1.bf16.msra.mxu0 %v224
    %991 = vmatprep.subr.bf16.mxu0 0
    %992 = vmatpush2.bf16.msra.mxu0 0
    %993 = vmatprep.subr.bf16.mxu0 0
    %994 = vmatpush2.bf16.msra.mxu0 0
    %995 = vmatprep.subr.bf16.mxu0 0
    %996 = vmatpush2.bf16.msra.mxu0 0
    %997 = vmatprep.subr.bf16.mxu0 0
    %998 = vmatpush2.bf16.msra.mxu0 0
    %999 = vmatprep.subr.bf16.mxu0 0
    %1000 = vmatpush2.bf16.msra.mxu0 0
    %1001 = vmatprep.subr.bf16.mxu0 0
    %1002 = vmatpush2.bf16.msra.mxu0 0
    %1003 = vmatprep.subr.bf16.mxu0 0
    %1004 = vmatpush2.bf16.msra.mxu0 0
    %1005 = vmatprep.subr.bf16.mxu0 0
    %1006 = vmatpush2.bf16.msra.mxu0 0
    %1007 = vmatprep.mubr.bf16.mxu0 0
    %1008 = vmatmul.mubr.bf16.gmra.mxu0 %v973
    %v1009 = vpop.f32.mrf.mxu0
    %v1010 = vadd.f32 0.0, %v1009
    %v1011 = vpop.f32.mrf.mxu0
    %v1012 = vpop.f32.mrf.mxu0
    %v1013 = vpop.f32.mrf.mxu0
    %1014 = vdwg.mxu0
    %v1015 = vadd.f32 %v965, %v1010
    %v1016 = vadd.f32 %v1015, %v110
    %v1017 = vxor.u32 %v1016, 2147483648
    %v1018 = vmul.f32 %v1017, 1.442695
    %v1019 = vpow.pop %v1018
    %v1020 = vadd.f32 %v1019, 1.0
    %v1021 = vrcp.pop %v1020
    %v1022 = vmul.f32 1.0, %v1021
    %v1023 = vtanh.pop %v1016
    %v1024 = vmul.f32 %v1022, %v886
    %1026 = vrot.lane.b32.xlu0 %v1023, 64
    %v1027 = vpop.permute.xlu0 %1026
    %v1029 = vmul.f32 %v1022, %v1027
    %1031 = vrot.lane.b32.xlu0 %v1029, 32
    %v1032 = vpop.permute.xlu0 %1031
    %v1034 = vadd.f32 %v1024, %v1032
    %v1035 = vtanh.pop %v1034
    %1037 = vrot.lane.b32.xlu0 %v1035, 64
    %v1038 = vpop.permute.xlu0 %1037
    %v1040 = vmul.f32 %v1022, %v1038
    %v1041 = vpack.c.bf16 %v1040, %v1040
    %s1042 = scalar_lea.vmem [#allocation7], 48
    %v1043 = vld [vmem:[%s1042] sm:$0xff]
    %v1044 = vadd.f32 %v1043, %v963
    %v1045 = vxor.u32 %v1044, 2147483648
    %v1046 = vmul.f32 %v1045, 1.442695
    %v1047 = vpow.pop %v1046
    %v1048 = vadd.f32 %v1047, 1.0
    %v1049 = vrcp.pop %v1048
    %v1050 = vmul.f32 1.0, %v1049
    %v1051 = vtanh.pop %v1044
    %v1052 = vmul.f32 %v1050, %v914
    %1054 = vrot.lane.b32.xlu0 %v1051, 64
    %v1055 = vpop.permute.xlu0 %1054
    %v1057 = vmul.f32 %v1050, %v1055
    %1059 = vrot.lane.b32.xlu0 %v1057, 32
    %v1060 = vpop.permute.xlu0 %1059
    %v1062 = vadd.f32 %v1052, %v1060
    %v1063 = vtanh.pop %v1062
    %1065 = vrot.lane.b32.xlu0 %v1063, 64
    %v1066 = vpop.permute.xlu0 %1065
    %v1068 = vmul.f32 %v1050, %v1066
    %v1069 = vpack.c.bf16 %v1068, %v1068
    %1071 = vrot.lane.b32.xlu0 %v1069, 32
    %v1072 = vpop.permute.xlu0 %1071
    %v1074 = vsel %vm171, %v1072, 0
    %1076 = vmatprep.subr.bf16.mxu0 0
    %1077 = vmatpush1.bf16.msra.mxu0 0
    %1078 = vmatprep.subr.bf16.mxu0 0
    %1079 = vmatpush1.bf16.msra.mxu0 0
    %1080 = vmatprep.subr.bf16.mxu0 0
    %1081 = vmatpush1.bf16.msra.mxu0 0
    %1082 = vmatprep.subr.bf16.mxu0 0
    %1083 = vmatpush1.bf16.msra.mxu0 0
    %1084 = vmatprep.subr.bf16.mxu0 0
    %1085 = vmatpush1.bf16.msra.mxu0 0
    %1086 = vmatprep.subr.bf16.mxu0 0
    %1087 = vmatpush1.bf16.msra.mxu0 0
    %1088 = vmatprep.subr.bf16.mxu0 %v166
    %1089 = vmatpush1.bf16.msra.mxu0 %v165
    %1090 = vmatprep.subr.bf16.mxu0 %v164
    %1091 = vmatpush1.bf16.msra.mxu0 %v163
    %1092 = vmatprep.subr.bf16.mxu0 0
    %1093 = vmatpush2.bf16.msra.mxu0 0
    %1094 = vmatprep.subr.bf16.mxu0 0
    %1095 = vmatpush2.bf16.msra.mxu0 0
    %1096 = vmatprep.subr.bf16.mxu0 0
    %1097 = vmatpush2.bf16.msra.mxu0 0
    %1098 = vmatprep.subr.bf16.mxu0 0
    %1099 = vmatpush2.bf16.msra.mxu0 0
    %1100 = vmatprep.subr.bf16.mxu0 0
    %1101 = vmatpush2.bf16.msra.mxu0 0
    %1102 = vmatprep.subr.bf16.mxu0 0
    %1103 = vmatpush2.bf16.msra.mxu0 0
    %1104 = vmatprep.subr.bf16.mxu0 0
    %1105 = vmatpush2.bf16.msra.mxu0 0
    %1106 = vmatprep.subr.bf16.mxu0 0
    %1107 = vmatpush2.bf16.msra.mxu0 0
    %1108 = vmatprep.mubr.bf16.mxu0 0
    %1109 = vmatmul.mubr.bf16.gmra.mxu0 %v1074
    %v1110 = vpop.f32.mrf.mxu0
    %v1111 = vadd.f32 0.0, %v1110
    %v1112 = vpop.f32.mrf.mxu0
    %v1113 = vadd.f32 0.0, %v1112
    %v1114 = vpop.f32.mrf.mxu0
    %v1115 = vpop.f32.mrf.mxu0
    %1116 = vdwg.mxu0
    %1118 = vrot.lane.b32.xlu0 %v1041, 32
    %v1119 = vpop.permute.xlu0 %1118
    %v1121 = vsel %vm171, %v1119, 0
    %1123 = vmatprep.subr.bf16.mxu0 0
    %1124 = vmatpush1.bf16.msra.mxu0 0
    %1125 = vmatprep.subr.bf16.mxu0 0
    %1126 = vmatpush1.bf16.msra.mxu0 0
    %1127 = vmatprep.subr.bf16.mxu0 0
    %1128 = vmatpush1.bf16.msra.mxu0 0
    %1129 = vmatprep.subr.bf16.mxu0 0
    %1130 = vmatpush1.bf16.msra.mxu0 0
    %1131 = vmatprep.subr.bf16.mxu0 0
    %1132 = vmatpush1.bf16.msra.mxu0 0
    %1133 = vmatprep.subr.bf16.mxu0 0
    %1134 = vmatpush1.bf16.msra.mxu0 0
    %1135 = vmatprep.subr.bf16.mxu0 0
    %1136 = vmatpush1.bf16.msra.mxu0 %v225
    %1137 = vmatprep.subr.bf16.mxu0 0
    %1138 = vmatpush1.bf16.msra.mxu0 %v224
    %1139 = vmatprep.subr.bf16.mxu0 0
    %1140 = vmatpush2.bf16.msra.mxu0 0
    %1141 = vmatprep.subr.bf16.mxu0 0
    %1142 = vmatpush2.bf16.msra.mxu0 0
    %1143 = vmatprep.subr.bf16.mxu0 0
    %1144 = vmatpush2.bf16.msra.mxu0 0
    %1145 = vmatprep.subr.bf16.mxu0 0
    %1146 = vmatpush2.bf16.msra.mxu0 0
    %1147 = vmatprep.subr.bf16.mxu0 0
    %1148 = vmatpush2.bf16.msra.mxu0 0
    %1149 = vmatprep.subr.bf16.mxu0 0
    %1150 = vmatpush2.bf16.msra.mxu0 0
    %1151 = vmatprep.subr.bf16.mxu0 0
    %1152 = vmatpush2.bf16.msra.mxu0 0
    %1153 = vmatprep.subr.bf16.mxu0 0
    %1154 = vmatpush2.bf16.msra.mxu0 0
    %1155 = vmatprep.mubr.bf16.mxu0 0
    %1156 = vmatmul.mubr.bf16.gmra.mxu0 %v1121
    %v1157 = vpop.f32.mrf.mxu0
    %v1158 = vadd.f32 0.0, %v1157
    %v1159 = vpop.f32.mrf.mxu0
    %v1160 = vpop.f32.mrf.mxu0
    %v1161 = vpop.f32.mrf.mxu0
    %1162 = vdwg.mxu0
    %v1163 = vadd.f32 %v1113, %v1158
    %v1164 = vadd.f32 %v1163, %v110
    %v1165 = vxor.u32 %v1164, 2147483648
    %v1166 = vmul.f32 %v1165, 1.442695
    %v1167 = vpow.pop %v1166
    %v1168 = vadd.f32 %v1167, 1.0
    %v1169 = vrcp.pop %v1168
    %v1170 = vmul.f32 1.0, %v1169
    %v1171 = vtanh.pop %v1164
    %v1172 = vmul.f32 %v1170, %v1034
    %1174 = vrot.lane.b32.xlu0 %v1171, 64
    %v1175 = vpop.permute.xlu0 %1174
    %v1177 = vmul.f32 %v1170, %v1175
    %1179 = vrot.lane.b32.xlu0 %v1177, 32
    %v1180 = vpop.permute.xlu0 %1179
    %v1182 = vadd.f32 %v1172, %v1180
    %v1183 = vtanh.pop %v1182
    %1185 = vrot.lane.b32.xlu0 %v1183, 64
    %v1186 = vpop.permute.xlu0 %1185
    %v1188 = vmul.f32 %v1170, %v1186
    %v1189 = vpack.c.bf16 %v1188, %v1188
    %s1190 = scalar_lea.vmem [#allocation7], 56
    %v1191 = vld [vmem:[%s1190] sm:$0xff]
    %v1192 = vadd.f32 %v1191, %v1111
    %v1193 = vxor.u32 %v1192, 2147483648
    %v1194 = vmul.f32 %v1193, 1.442695
    %v1195 = vpow.pop %v1194
    %v1196 = vadd.f32 %v1195, 1.0
    %v1197 = vrcp.pop %v1196
    %v1198 = vmul.f32 1.0, %v1197
    %v1199 = vtanh.pop %v1192
    %v1200 = vmul.f32 %v1198, %v1062
    %1202 = vrot.lane.b32.xlu0 %v1199, 64
    %v1203 = vpop.permute.xlu0 %1202
    %v1205 = vmul.f32 %v1198, %v1203
    %1207 = vrot.lane.b32.xlu0 %v1205, 32
    %v1208 = vpop.permute.xlu0 %1207
    %v1210 = vadd.f32 %v1200, %v1208
    %v1211 = vtanh.pop %v1210
    %1213 = vrot.lane.b32.xlu0 %v1211, 64
    %v1214 = vpop.permute.xlu0 %1213
    %v1216 = vmul.f32 %v1198, %v1214
    %v1217 = vpack.c.bf16 %v1216, %v1216
    %1219 = vrot.lane.b32.xlu0 %v1217, 32
    %v1220 = vpop.permute.xlu0 %1219
    %v1222 = vsel %vm171, %v1220, 0
    %1224 = vmatprep.subr.bf16.mxu0 0
    %1225 = vmatpush1.bf16.msra.mxu0 0
    %1226 = vmatprep.subr.bf16.mxu0 0
    %1227 = vmatpush1.bf16.msra.mxu0 0
    %1228 = vmatprep.subr.bf16.mxu0 0
    %1229 = vmatpush1.bf16.msra.mxu0 0
    %1230 = vmatprep.subr.bf16.mxu0 0
    %1231 = vmatpush1.bf16.msra.mxu0 0
    %1232 = vmatprep.subr.bf16.mxu0 0
    %1233 = vmatpush1.bf16.msra.mxu0 0
    %1234 = vmatprep.subr.bf16.mxu0 0
    %1235 = vmatpush1.bf16.msra.mxu0 0
    %1236 = vmatprep.subr.bf16.mxu0 %v166
    %1237 = vmatpush1.bf16.msra.mxu0 %v165
    %1238 = vmatprep.subr.bf16.mxu0 %v164
    %1239 = vmatpush1.bf16.msra.mxu0 %v163
    %1240 = vmatprep.subr.bf16.mxu0 0
    %1241 = vmatpush2.bf16.msra.mxu0 0
    %1242 = vmatprep.subr.bf16.mxu0 0
    %1243 = vmatpush2.bf16.msra.mxu0 0
    %1244 = vmatprep.subr.bf16.mxu0 0
    %1245 = vmatpush2.bf16.msra.mxu0 0
    %1246 = vmatprep.subr.bf16.mxu0 0
    %1247 = vmatpush2.bf16.msra.mxu0 0
    %1248 = vmatprep.subr.bf16.mxu0 0
    %1249 = vmatpush2.bf16.msra.mxu0 0
    %1250 = vmatprep.subr.bf16.mxu0 0
    %1251 = vmatpush2.bf16.msra.mxu0 0
    %1252 = vmatprep.subr.bf16.mxu0 0
    %1253 = vmatpush2.bf16.msra.mxu0 0
    %1254 = vmatprep.subr.bf16.mxu0 0
    %1255 = vmatpush2.bf16.msra.mxu0 0
    %1256 = vmatprep.mubr.bf16.mxu0 0
    %1257 = vmatmul.mubr.bf16.gmra.mxu0 %v1222
    %v1258 = vpop.f32.mrf.mxu0
    %v1259 = vadd.f32 0.0, %v1258
    %v1260 = vpop.f32.mrf.mxu0
    %v1261 = vadd.f32 0.0, %v1260
    %v1262 = vpop.f32.mrf.mxu0
    %v1263 = vpop.f32.mrf.mxu0
    %1264 = vdwg.mxu0
    %1266 = vrot.lane.b32.xlu0 %v1189, 32
    %v1267 = vpop.permute.xlu0 %1266
    %v1269 = vsel %vm171, %v1267, 0
    %1271 = vmatprep.subr.bf16.mxu0 0
    %1272 = vmatpush1.bf16.msra.mxu0 0
    %1273 = vmatprep.subr.bf16.mxu0 0
    %1274 = vmatpush1.bf16.msra.mxu0 0
    %1275 = vmatprep.subr.bf16.mxu0 0
    %1276 = vmatpush1.bf16.msra.mxu0 0
    %1277 = vmatprep.subr.bf16.mxu0 0
    %1278 = vmatpush1.bf16.msra.mxu0 0
    %1279 = vmatprep.subr.bf16.mxu0 0
    %1280 = vmatpush1.bf16.msra.mxu0 0
    %1281 = vmatprep.subr.bf16.mxu0 0
    %1282 = vmatpush1.bf16.msra.mxu0 0
    %1283 = vmatprep.subr.bf16.mxu0 0
    %1284 = vmatpush1.bf16.msra.mxu0 %v225
    %1285 = vmatprep.subr.bf16.mxu0 0
    %1286 = vmatpush1.bf16.msra.mxu0 %v224
    %1287 = vmatprep.subr.bf16.mxu0 0
    %1288 = vmatpush2.bf16.msra.mxu0 0
    %1289 = vmatprep.subr.bf16.mxu0 0
    %1290 = vmatpush2.bf16.msra.mxu0 0
    %1291 = vmatprep.subr.bf16.mxu0 0
    %1292 = vmatpush2.bf16.msra.mxu0 0
    %1293 = vmatprep.subr.bf16.mxu0 0
    %1294 = vmatpush2.bf16.msra.mxu0 0
    %1295 = vmatprep.subr.bf16.mxu0 0
    %1296 = vmatpush2.bf16.msra.mxu0 0
    %1297 = vmatprep.subr.bf16.mxu0 0
    %1298 = vmatpush2.bf16.msra.mxu0 0
    %1299 = vmatprep.subr.bf16.mxu0 0
    %1300 = vmatpush2.bf16.msra.mxu0 0
    %1301 = vmatprep.subr.bf16.mxu0 0
    %1302 = vmatpush2.bf16.msra.mxu0 0
    %1303 = vmatprep.mubr.bf16.mxu0 0
    %1304 = vmatmul.mubr.bf16.gmra.mxu0 %v1269
    %v1305 = vpop.f32.mrf.mxu0
    %v1306 = vadd.f32 0.0, %v1305
    %v1307 = vpop.f32.mrf.mxu0
    %v1308 = vpop.f32.mrf.mxu0
    %v1309 = vpop.f32.mrf.mxu0
    %1310 = vdwg.mxu0
    %v1311 = vadd.f32 %v1261, %v1306
    %v1312 = vadd.f32 %v1311, %v110
    %v1313 = vxor.u32 %v1312, 2147483648
    %v1314 = vmul.f32 %v1313, 1.442695
    %v1315 = vpow.pop %v1314
    %v1316 = vadd.f32 %v1315, 1.0
    %v1317 = vrcp.pop %v1316
    %v1318 = vmul.f32 1.0, %v1317
    %v1319 = vtanh.pop %v1312
    %v1320 = vmul.f32 %v1318, %v1182
    %1322 = vrot.lane.b32.xlu0 %v1319, 64
    %v1323 = vpop.permute.xlu0 %1322
    %v1325 = vmul.f32 %v1318, %v1323
    %1327 = vrot.lane.b32.xlu0 %v1325, 32
    %v1328 = vpop.permute.xlu0 %1327
    %v1330 = vadd.f32 %v1320, %v1328
    %v1331 = vtanh.pop %v1330
    %1333 = vrot.lane.b32.xlu0 %v1331, 64
    %v1334 = vpop.permute.xlu0 %1333
    %v1336 = vmul.f32 %v1318, %v1334
    %v1337 = vpack.c.bf16 %v1336, %v1336
    %1338 = vst [vmem:[#allocation2] sm:$0xff] %v1259
    %1339 = vst [vmem:[#allocation2 + $0x8] sm:$0xff] %v1261
    %1341 = vrot.lane.b32.xlu0 %v1210, 96
    %v1342 = vpop.permute.xlu0 %1341
    %1344 = vst.msk [vmem:[#allocation3] sm:$0xff] %vm171, %v1342
    %v1345 = vunpack.c.l.bf16 %v1337
    %1347 = vrot.lane.b32.xlu0 %v1345, 32
    %v1348 = vpop.permute.xlu0 %1347
    %1350 = vst.msk [vmem:[#allocation4] sm:$0xff] %vm171, %v1348
    %1352 = vrot.lane.b32.xlu0 %v1330, 96
    %v1353 = vpop.permute.xlu0 %1352
    %1355 = vst.msk [vmem:[#allocation5] sm:$0xff] %vm171, %v1353
    // Predicated region
    $region54: #{tpu_custom_call.1} parent=1 // pred_check
      %p1356 = pneg %p87
    $region55: #{tpu_custom_call.1} parent=1 // pred_check_branch
      %1358 = sbr.rel (%p1356) target = $region57
    $region56: #{tpu_custom_call.1} parent=1 // pred_region
      %v1359 = vld [vmem:[#allocation12] sm:$0xf]
      %v1360 = vld [vmem:[#allocation12 + $0x4] sm:$0xf]
      %v1361 = vld [vmem:[#allocation12 + $0x8] sm:$0xf]
      %v1362 = vld [vmem:[#allocation12 + $0xc] sm:$0xf]
      %v1363 = vld [vmem:[%s5] sm:$0x1]
      %v1365 = vlaneseq
      %v1366 = vshrl.u32 %v1365, 7
      %v1367 = vsub.s32 0, %v1366
      %v1368 = vrot.slane %v1363, %v1367
      %1371 = vrot.lane.b32.xlu0 %v1337, 32
      %v1372 = vpop.permute.xlu0 %1371
      %v1377 = vunpack.c.l.b16 %v1359
      %v1378 = vunpack.c.l.b16 %v1360
      %v1379 = vunpack.c.l.b16 %v1361
      %v1380 = vunpack.c.l.b16 %v1362
      %v1381 = vpack.c.b16 %v1378, %v1377
      %v1382 = vpack.c.b16 %v1380, %v1379
      %v1386 = vsel %vm171, %v1372, 0
      %1388 = vmatprep.subr.bf16.mxu0 0
      %1389 = vmatpush1.bf16.msra.mxu0 0
      %1390 = vmatprep.subr.bf16.mxu0 0
      %1391 = vmatpush1.bf16.msra.mxu0 0
      %1392 = vmatprep.subr.bf16.mxu0 0
      %1393 = vmatpush1.bf16.msra.mxu0 0
      %1394 = vmatprep.subr.bf16.mxu0 0
      %1395 = vmatpush1.bf16.msra.mxu0 0
      %1396 = vmatprep.subr.bf16.mxu0 0
      %1397 = vmatpush1.bf16.msra.mxu0 0
      %1398 = vmatprep.subr.bf16.mxu0 0
      %1399 = vmatpush1.bf16.msra.mxu0 0
      %1400 = vmatprep.subr.bf16.mxu0 0
      %1401 = vmatpush1.bf16.msra.mxu0 %v1382
      %1402 = vmatprep.subr.bf16.mxu0 0
      %1403 = vmatpush1.bf16.msra.mxu0 %v1381
      %1404 = vmatprep.subr.bf16.mxu0 0
      %1405 = vmatpush2.bf16.msra.mxu0 0
      %1406 = vmatprep.subr.bf16.mxu0 0
      %1407 = vmatpush2.bf16.msra.mxu0 0
      %1408 = vmatprep.subr.bf16.mxu0 0
      %1409 = vmatpush2.bf16.msra.mxu0 0
      %1410 = vmatprep.subr.bf16.mxu0 0
      %1411 = vmatpush2.bf16.msra.mxu0 0
      %1412 = vmatprep.subr.bf16.mxu0 0
      %1413 = vmatpush2.bf16.msra.mxu0 0
      %1414 = vmatprep.subr.bf16.mxu0 0
      %1415 = vmatpush2.bf16.msra.mxu0 0
      %1416 = vmatprep.subr.bf16.mxu0 0
      %1417 = vmatpush2.bf16.msra.mxu0 0
      %1418 = vmatprep.subr.bf16.mxu0 0
      %1419 = vmatpush2.bf16.msra.mxu0 0
      %1420 = vmatprep.mubr.bf16.mxu0 0
      %1421 = vmatmul.mubr.bf16.gmra.mxu0 %v1386
      %v1422 = vpop.f32.mrf.mxu0
      %v1423 = vadd.f32 %v1368, %v1422
      %v1424 = vpop.f32.mrf.mxu0
      %v1425 = vpop.f32.mrf.mxu0
      %v1426 = vpop.f32.mrf.mxu0
      %1427 = vdwg.mxu0
      %v1428 = vmax.f32 %v1423, 0.0
      %v1429 = vld [vmem:[%s6] sm:$0x1]
      %v1430 = vunpack.c.l.bf16 %v1429
      %v1431 = vpack.c.bf16 %v1428, %v1428
      %v1432 = vunpack.c.l.bf16 %v1431
      %v1433 = vlaneseq
      %v1434 = vshrl.u32 %v1433, 7
      %v1435 = vsub.s32 0, %v1434
      %v1436 = vrot.slane %v1430, %v1435
      %v1437 = vmul.f32 %v1432, %v1436
      %v1438 = vsel %vm171, %v1437, 0.0
      %1439 = vadd.xlane.f32.xlu0 %v1438
      %v1440 = vpop.xlane.xlu0 %1439
      %v1441 = vld [vmem:[#allocation6] sm:$0x1]
      %v1443 = vlaneseq
      %v1444 = vshrl.u32 %v1443, 7
      %v1445 = vsub.s32 0, %v1444
      %v1446 = vrot.slane %v1441, %v1445
      %v1448 = vadd.f32 %v1440, %v1446
      %vm1449 = vcmask 7168
      %1450 = vst.msk [vmem:[%s8] sm:$0xff] %vm1449, %v1448
    $region57: #{tpu_custom_call.1} parent=1 // pred_fallthru
      _
    // Predicated region
    $region58: #{tpu_custom_call.1} parent=1 // pred_check
      _
    $region59: #{tpu_custom_call.1} parent=1 // pred_check_branch
      %1452 = sbr.rel (0) target = $region61
    $region60: #{tpu_custom_call.1} parent=1 // pred_region
      _
    $region61: #{tpu_custom_call.1} parent=1 // pred_fallthru
      _
    // Predicated region
    $region62: #{tpu_custom_call.1} parent=1 // pred_check
      _
    $region63: #{tpu_custom_call.1} parent=1 // pred_check_branch
      %1454 = sbr.rel (0) target = $region65
    $region64: #{tpu_custom_call.1} parent=1 // pred_region
      _
    $region65: #{tpu_custom_call.1} parent=1 // pred_fallthru
      _
    %1455 = vsyncpa [#allocation8], 1
    %1456 = vsyncpa [#allocation10], 1
    %1457 = vsyncpa [#allocation13], 1

</llo_original>
